<compile_context>
chip_gen: v7x
topology: tpu7x:2x2x1
jax: 0.10.0
libtpu: 0.0.40
codegen_flags: <defaults>
</compile_context>

<pallas_src>
import functools

import jax
import jax.numpy as jnp
import numpy as np
from jax.experimental import pallas as pl
from jax.experimental.pallas import tpu as pltpu


# ---------------------------------------------------------------------------
# Fused kernel: B_STEP images per grid step, everything in (rows, H*W) layout.
# ---------------------------------------------------------------------------
def _c3_kernel(x_ref, m1_ref, m2_ref, w0_ref, b0_ref, wbr_ref, bout_ref, o_ref,
               *, k, H, W, PAD, uniq_dils):
    f32 = jnp.float32
    HW = H * W

    def pad_lanes(a):
        # (R, HW) -> (R, HW + 2*PAD): zero-extended flat image (128-aligned concat).
        z = jnp.zeros((a.shape[0], PAD), f32)
        return jnp.concatenate([z, a, z], axis=1)

    def taps(ap, d, get_mask):
        # All k*k masked tap-shifts of the zero-extended flat image `ap`.
        p = (k // 2) * d
        pieces = []
        for ki in range(k):
            for kj in range(k):
                dh = ki * d - p
                dw = kj * d - p
                start = PAD + dh * W + dw
                sh = ap[:, start:start + HW]            # static lane slice
                if dh == 0 and dw == 0:                 # center tap: mask is all-ones
                    pieces.append(sh)
                else:
                    pieces.append(sh * get_mask(ki * k + kj))
        return pieces

    x = x_ref[...].astype(f32)                          # (B*Cin, HW)

    # Stage 1: concentration separable conv (depthwise d=1 + 1x1) fully folded
    # into a single MXU matmul over the tap-stacked image.
    im0 = jnp.concatenate(taps(pad_lanes(x), 1, lambda t: m1_ref[t]), axis=0)
    inter = jnp.dot(w0_ref[...], im0, preferred_element_type=f32) + b0_ref[...]

    # Stage 2: all dilation branches (depthwise + 1x1) and the 1x1 combiner,
    # folded into one matmul; the trailing piece is `inter` (last concat segment).
    ip = pad_lanes(inter)
    pieces = []
    for di, d in enumerate(uniq_dils):
        pieces += taps(ip, d, lambda t, _di=di: m2_ref[_di, t])
    pieces.append(inter)
    im1 = jnp.concatenate(pieces, axis=0)
    out = jnp.dot(wbr_ref[...], im1, preferred_element_type=f32) + bout_ref[...]

    o_ref[...] = out.astype(o_ref.dtype)


# ---------------------------------------------------------------------------
# Wrapper: trace-time mask building + weight folding + a single pallas_call.
# ---------------------------------------------------------------------------
def c3_block(x_nchw, params, *, kernel_size, dilations):
    N, Cin, H, W = x_nchw.shape
    HW = H * W
    k = kernel_size
    dilations = tuple(dilations)
    n_br = len(dilations)
    rf = n_br + 1

    dw_w0, dw_b0, pw_w0, pw_b0 = params["conc"]
    cr = pw_w0.shape[0]
    Cout = params["combiner_w"].shape[0]

    if k % 2 != 1:
        raise ValueError("kernel_size must be odd")
    if HW % 128 != 0:
        raise ValueError("H*W must be a multiple of 128 for the lane-dense layout")

    # Unique branch dilations: branches sharing a dilation share shifts/masks and
    # their folded weights are summed.
    uniq = []
    for d in dilations:
        if d not in uniq:
            uniq.append(d)
    midx = {d: i for i, d in enumerate(uniq)}
    n_ud = len(uniq)

    # Zero-extension pad (lanes) must cover the largest flat tap offset p*(W+1);
    # rounded to a 128-lane multiple so the in-kernel concat stays aligned.
    max_off = (k // 2) * max((1,) + dilations) * (W + 1)
    PAD = max(128, ((max_off + 127) // 128) * 128)
    assert PAD >= max_off

    # ---- images per grid step: fill sublanes, keep per-step VMEM small --------
    def step_bytes(b):
        rows_im0 = k * k * b * Cin
        rows_im1 = (n_ud * k * k + 1) * b * cr
        acts = (rows_im0 + rows_im1 + 3 * b * (Cin + cr + Cout)) * HW
        wts = b * cr * rows_im0 + b * Cout * rows_im1
        msk = (k * k * b * Cin + n_ud * k * k * b * cr) * HW
        return 4 * (acts + wts + msk)

    candidates = [b for b in range(1, N + 1) if N % b == 0 and
                  (b == N or ((b * Cin) % 8 == 0 and (b * Cout) % 8 == 0))]
    b_step = N
    for b in candidates:                      # ascending -> keep the largest in budget
        if step_bytes(b) <= (6 << 20):
            b_step = b
    if step_bytes(b_step) > (6 << 20):
        b_step = candidates[0]
    Rin, Rcr, Rout = b_step * Cin, b_step * cr, b_step * Cout

    # ---- border masks: precomputed once at trace time, sublane-replicated -----
    hh = np.arange(HW, dtype=np.int64) // W
    ww = np.arange(HW, dtype=np.int64) % W

    def tap_masks(d):
        p = (k // 2) * d
        m = np.zeros((k * k, HW), np.float32)
        for ki in range(k):
            for kj in range(k):
                dh, dw = ki * d - p, kj * d - p
                ok = (hh + dh >= 0) & (hh + dh < H) & (ww + dw >= 0) & (ww + dw < W)
                m[ki * k + kj] = ok.astype(np.float32)
        return m

    masks1 = jnp.asarray(np.ascontiguousarray(
        np.broadcast_to(tap_masks(1)[:, None, :], (k * k, Rin, HW))))
    base2 = np.stack([tap_masks(d) for d in uniq])                 # (n_ud, k*k, HW)
    masks2 = jnp.asarray(np.ascontiguousarray(
        np.broadcast_to(base2[:, :, None, :], (n_ud, k * k, Rcr, HW))))

    # ---- trace-time weight folding (tiny matrices, full precision) ------------
    def block_diag(mat, b):
        r, c = mat.shape
        eye = jnp.eye(b, dtype=mat.dtype)
        return (eye[:, None, :, None] * mat[None, :, None, :]).reshape(b * r, b * c)

    with jax.default_matmul_precision("highest"):
        # Stage 1: W0_t = Wpw0 * diag(wdw0_t), tap-stacked, block-diag over images.
        wdw0 = dw_w0.reshape(Cin, k * k)
        w0_bd = jnp.concatenate(
            [block_diag(pw_w0 * wdw0[:, t][None, :], b_step) for t in range(k * k)],
            axis=1)                                                 # (Rcr, k*k*Rin)
        b0 = pw_w0 @ dw_b0 + pw_b0                                  # (cr,)
        b0_full = jnp.broadcast_to(jnp.tile(b0, b_step)[:, None], (Rcr, HW))

        # Stage 2: branch pointwise + combiner folded into per-(dilation, tap)
        # weights, merged over branches sharing a dilation; trailing segment = inter.
        Wcomb = params["combiner_w"]
        Wc = [Wcomb[:, i * cr:(i + 1) * cr] for i in range(rf)]     # concat segments
        md = [[jnp.zeros((Cout, cr), jnp.float32) for _ in range(k * k)]
              for _ in range(n_ud)]
        b_out = params["combiner_b"]
        for i, d in enumerate(dilations):
            dw_wi, dw_bi, pw_wi, pw_bi = params["branches"][i]
            G = Wc[i] @ pw_wi                                       # (Cout, cr)
            wdwi = dw_wi.reshape(cr, k * k)
            for t in range(k * k):
                md[midx[d]][t] = md[midx[d]][t] + G * wdwi[:, t][None, :]
            b_out = b_out + G @ dw_bi + Wc[i] @ pw_bi
        cols = [block_diag(md[di][t], b_step)
                for di in range(n_ud) for t in range(k * k)]
        cols.append(block_diag(Wc[n_br], b_step))                   # `inter` segment
        wbr_bd = jnp.concatenate(cols, axis=1)         # (Rout, (n_ud*k*k+1)*Rcr)
        bout_full = jnp.broadcast_to(jnp.tile(b_out, b_step)[:, None], (Rout, HW))

    x_flat = x_nchw.reshape(N * Cin, HW)               # pure reshape, no transpose

    kernel = functools.partial(_c3_kernel, k=k, H=H, W=W, PAD=PAD,
                               uniq_dils=tuple(uniq))

    def full(shape):   # whole array, constant index_map -> DMA'd once, VMEM-resident
        return pl.BlockSpec(shape, lambda n, _r=len(shape): (0,) * _r)

    out = pl.pallas_call(
        kernel,
        out_shape=jax.ShapeDtypeStruct((N * Cout, HW), x_nchw.dtype),
        grid=(N // b_step,),
        in_specs=[
            pl.BlockSpec((Rin, HW), lambda n: (n, 0)),              # x (per batch chunk)
            full((k * k, Rin, HW)),                                 # d=1 masks
            full((n_ud, k * k, Rcr, HW)),                           # branch masks
            full((Rcr, k * k * Rin)),                               # folded stage-1 weight
            full((Rcr, HW)),                                        # folded stage-1 bias
            full((Rout, (n_ud * k * k + 1) * Rcr)),                 # folded stage-2 weight
            full((Rout, HW)),                                       # folded output bias
        ],
        out_specs=pl.BlockSpec((Rout, HW), lambda n: (n, 0)),
        compiler_params=pltpu.CompilerParams(dimension_semantics=("parallel",)),
    )(x_flat, masks1, masks2, w0_bd, b0_full, wbr_bd, bout_full)

    return out.reshape(N, Cout, H, W)                   # pure reshape back to NCHW


# ---------------------------------------------------------------------------
# Deterministic parameter init (PyTorch-natural shapes).
# ---------------------------------------------------------------------------
def init_c3_params(key, in_channels, out_channels, kernel_size, dilations):
    rf = len(dilations) + 1
    cr = out_channels // rf
    k = kernel_size
    keys = iter(jax.random.split(key, 6 + 4 * len(dilations)))

    def u(shape, fan_in):
        bound = 1.0 / float(np.sqrt(fan_in))
        return jax.random.uniform(next(keys), shape, jnp.float32, -bound, bound)

    params = {
        "conc": (u((in_channels, k, k), k * k),          # depthwise weight (C, k, k)
                 u((in_channels,), k * k),               # depthwise bias
                 u((cr, in_channels), in_channels),      # pointwise weight (Cout, Cin)
                 u((cr,), in_channels)),                 # pointwise bias
        "branches": [(u((cr, k, k), k * k), u((cr,), k * k),
                      u((cr, cr), cr), u((cr,), cr)) for _ in dilations],
        "combiner_w": u((out_channels, cr * rf), cr * rf),
        "combiner_b": u((out_channels,), cr * rf),
    }
    return params


# ---------------------------------------------------------------------------
# Pure-JAX reference (lax convs) for correctness check.
# ---------------------------------------------------------------------------
def _sepconv_ref(x, dw_w, dw_b, pw_w, pw_b, k, dilation):
    C = x.shape[1]
    p = (k // 2) * dilation
    hi = jax.lax.Precision.HIGHEST
    y = jax.lax.conv_general_dilated(
        x, dw_w[:, None, :, :], (1, 1), [(p, p), (p, p)],
        rhs_dilation=(dilation, dilation),
        dimension_numbers=("NCHW", "OIHW", "NCHW"),
        feature_group_count=C, precision=hi) + dw_b[None, :, None, None]
    return jax.lax.conv_general_dilated(
        y, pw_w[:, :, None, None], (1, 1), "VALID",
        dimension_numbers=("NCHW", "OIHW", "NCHW"),
        precision=hi) + pw_b[None, :, None, None]


def _c3_ref(x, params, k, dilations):
    inter = _sepconv_ref(x, *params["conc"], k, 1)
    outs = [_sepconv_ref(inter, *params["branches"][i], k, d)
            for i, d in enumerate(dilations)]
    cat = jnp.concatenate(outs + [inter], axis=1)
    return jax.lax.conv_general_dilated(
        cat, params["combiner_w"][:, :, None, None], (1, 1), "VALID",
        dimension_numbers=("NCHW", "OIHW", "NCHW"),
        precision=jax.lax.Precision.HIGHEST
    ) + params["combiner_b"][None, :, None, None]


# ---------------------------------------------------------------------------
if __name__ == "__main__":
    batch, in_channels, out_channels = 2, 4, 16
    kernel_size = 3
    dilations = (1, 2, 3)          # reduction_factor = 4, C_r = 4
    H = W = 16

    key = jax.random.PRNGKey(0)
    kx, kp = jax.random.split(key)
    x = jax.random.normal(kx, (batch, in_channels, H, W), jnp.float32)
    params = init_c3_params(kp, in_channels, out_channels, kernel_size, dilations)

    fwd = jax.jit(functools.partial(c3_block, kernel_size=kernel_size,
                                    dilations=dilations))
    out = jax.block_until_ready(fwd(x, params))
    assert out.shape == (batch, out_channels, H, W), out.shape

    ref = jax.block_until_ready(_c3_ref(x, params, kernel_size, dilations))
    np.testing.assert_allclose(np.asarray(out), np.asarray(ref),
                               rtol=2e-2, atol=2e-2)

    print("KERNEL_OK")
</pallas_src>

<mosaic_0001>
module attributes {stable_mosaic.version = 11 : i64} {
  func.func @_c3_kernel(%arg0: i32, %arg1: memref<8x256xf32, #tpu.memory_space<vmem>>, %arg2: memref<9x8x256xf32, #tpu.memory_space<vmem>>, %arg3: memref<3x9x8x256xf32, #tpu.memory_space<vmem>>, %arg4: memref<8x72xf32, #tpu.memory_space<vmem>>, %arg5: memref<8x256xf32, #tpu.memory_space<vmem>>, %arg6: memref<32x224xf32, #tpu.memory_space<vmem>>, %arg7: memref<32x256xf32, #tpu.memory_space<vmem>>, %arg8: memref<32x256xf32, #tpu.memory_space<vmem>>) attributes {dimension_semantics = [#tpu.dimension_semantics<parallel>], iteration_bounds = array<i64: 1>, scalar_prefetch = 0 : i64, scratch_operands = 0 : i64, tpu.core_type = #tpu.core_type<tc>, window_params = [{transform_indices = @transform_0, window_bounds = array<i64: 8, 256>}, {pipeline_mode = #tpu.pipeline_mode<synchronous>, transform_indices = @transform_1, window_bounds = array<i64: 9, 8, 256>}, {pipeline_mode = #tpu.pipeline_mode<synchronous>, transform_indices = @transform_2, window_bounds = array<i64: 3, 9, 8, 256>}, {pipeline_mode = #tpu.pipeline_mode<synchronous>, transform_indices = @transform_3, window_bounds = array<i64: 8, 72>}, {pipeline_mode = #tpu.pipeline_mode<synchronous>, transform_indices = @transform_4, window_bounds = array<i64: 8, 256>}, {pipeline_mode = #tpu.pipeline_mode<synchronous>, transform_indices = @transform_5, window_bounds = array<i64: 32, 224>}, {pipeline_mode = #tpu.pipeline_mode<synchronous>, transform_indices = @transform_6, window_bounds = array<i64: 32, 256>}, {transform_indices = @transform_7, window_bounds = array<i64: 32, 256>}]} {
    %c0 = arith.constant 0 : index
    %c0_0 = arith.constant 0 : index
    %0 = vector.load %arg1[%c0, %c0_0] : memref<8x256xf32, #tpu.memory_space<vmem>>, vector<8x256xf32>
    %cst = arith.constant 0.000000e+00 : f32
    %1 = vector.broadcast %cst : f32 to vector<8x128xf32>
    %2 = tpu.concatenate %1, %0, %1 in 1 : vector<8x128xf32>, vector<8x256xf32>, vector<8x128xf32> -> vector<8x512xf32>
    %3 = vector.extract_strided_slice %2 {offsets = [0, 111], sizes = [8, 256], strides = [1, 1]} : vector<8x512xf32> to vector<8x256xf32>
    %c0_1 = arith.constant 0 : index
    %c0_2 = arith.constant 0 : index
    %c0_3 = arith.constant 0 : index
    %4 = vector.load %arg2[%c0_1, %c0_2, %c0_3] : memref<9x8x256xf32, #tpu.memory_space<vmem>>, vector<1x8x256xf32>
    %5 = vector.shape_cast %4 : vector<1x8x256xf32> to vector<8x256xf32>
    %6 = arith.mulf %3, %5 : vector<8x256xf32>
    %7 = vector.extract_strided_slice %2 {offsets = [0, 112], sizes = [8, 256], strides = [1, 1]} : vector<8x512xf32> to vector<8x256xf32>
    %c1 = arith.constant 1 : index
    %c0_4 = arith.constant 0 : index
    %c0_5 = arith.constant 0 : index
    %8 = vector.load %arg2[%c1, %c0_4, %c0_5] : memref<9x8x256xf32, #tpu.memory_space<vmem>>, vector<1x8x256xf32>
    %9 = vector.shape_cast %8 : vector<1x8x256xf32> to vector<8x256xf32>
    %10 = arith.mulf %7, %9 : vector<8x256xf32>
    %11 = vector.extract_strided_slice %2 {offsets = [0, 113], sizes = [8, 256], strides = [1, 1]} : vector<8x512xf32> to vector<8x256xf32>
    %c2 = arith.constant 2 : index
    %c0_6 = arith.constant 0 : index
    %c0_7 = arith.constant 0 : index
    %12 = vector.load %arg2[%c2, %c0_6, %c0_7] : memref<9x8x256xf32, #tpu.memory_space<vmem>>, vector<1x8x256xf32>
    %13 = vector.shape_cast %12 : vector<1x8x256xf32> to vector<8x256xf32>
    %14 = arith.mulf %11, %13 : vector<8x256xf32>
    %15 = vector.extract_strided_slice %2 {offsets = [0, 127], sizes = [8, 256], strides = [1, 1]} : vector<8x512xf32> to vector<8x256xf32>
    %c3 = arith.constant 3 : index
    %c0_8 = arith.constant 0 : index
    %c0_9 = arith.constant 0 : index
    %16 = vector.load %arg2[%c3, %c0_8, %c0_9] : memref<9x8x256xf32, #tpu.memory_space<vmem>>, vector<1x8x256xf32>
    %17 = vector.shape_cast %16 : vector<1x8x256xf32> to vector<8x256xf32>
    %18 = arith.mulf %15, %17 : vector<8x256xf32>
    %19 = vector.extract_strided_slice %2 {offsets = [0, 128], sizes = [8, 256], strides = [1, 1]} : vector<8x512xf32> to vector<8x256xf32>
    %20 = vector.extract_strided_slice %2 {offsets = [0, 129], sizes = [8, 256], strides = [1, 1]} : vector<8x512xf32> to vector<8x256xf32>
    %c5 = arith.constant 5 : index
    %c0_10 = arith.constant 0 : index
    %c0_11 = arith.constant 0 : index
    %21 = vector.load %arg2[%c5, %c0_10, %c0_11] : memref<9x8x256xf32, #tpu.memory_space<vmem>>, vector<1x8x256xf32>
    %22 = vector.shape_cast %21 : vector<1x8x256xf32> to vector<8x256xf32>
    %23 = arith.mulf %20, %22 : vector<8x256xf32>
    %24 = vector.extract_strided_slice %2 {offsets = [0, 143], sizes = [8, 256], strides = [1, 1]} : vector<8x512xf32> to vector<8x256xf32>
    %c6 = arith.constant 6 : index
    %c0_12 = arith.constant 0 : index
    %c0_13 = arith.constant 0 : index
    %25 = vector.load %arg2[%c6, %c0_12, %c0_13] : memref<9x8x256xf32, #tpu.memory_space<vmem>>, vector<1x8x256xf32>
    %26 = vector.shape_cast %25 : vector<1x8x256xf32> to vector<8x256xf32>
    %27 = arith.mulf %24, %26 : vector<8x256xf32>
    %28 = vector.extract_strided_slice %2 {offsets = [0, 144], sizes = [8, 256], strides = [1, 1]} : vector<8x512xf32> to vector<8x256xf32>
    %c7 = arith.constant 7 : index
    %c0_14 = arith.constant 0 : index
    %c0_15 = arith.constant 0 : index
    %29 = vector.load %arg2[%c7, %c0_14, %c0_15] : memref<9x8x256xf32, #tpu.memory_space<vmem>>, vector<1x8x256xf32>
    %30 = vector.shape_cast %29 : vector<1x8x256xf32> to vector<8x256xf32>
    %31 = arith.mulf %28, %30 : vector<8x256xf32>
    %32 = vector.extract_strided_slice %2 {offsets = [0, 145], sizes = [8, 256], strides = [1, 1]} : vector<8x512xf32> to vector<8x256xf32>
    %c8 = arith.constant 8 : index
    %c0_16 = arith.constant 0 : index
    %c0_17 = arith.constant 0 : index
    %33 = vector.load %arg2[%c8, %c0_16, %c0_17] : memref<9x8x256xf32, #tpu.memory_space<vmem>>, vector<1x8x256xf32>
    %34 = vector.shape_cast %33 : vector<1x8x256xf32> to vector<8x256xf32>
    %35 = arith.mulf %32, %34 : vector<8x256xf32>
    %36 = tpu.concatenate %6, %10, %14, %18, %19, %23, %27, %31, %35 in 0 : vector<8x256xf32>, vector<8x256xf32>, vector<8x256xf32>, vector<8x256xf32>, vector<8x256xf32>, vector<8x256xf32>, vector<8x256xf32>, vector<8x256xf32>, vector<8x256xf32> -> vector<72x256xf32>
    %c0_18 = arith.constant 0 : index
    %c0_19 = arith.constant 0 : index
    %37 = vector.load %arg4[%c0_18, %c0_19] : memref<8x72xf32, #tpu.memory_space<vmem>>, vector<8x72xf32>
    %cst_20 = arith.constant dense<0.000000e+00> : vector<8x256xf32>
    %38 = tpu.matmul %37, %36, %cst_20 {dimension_numbers = #tpu.dot_dimension_numbers<[1], [0], [0], [1], [0, 0, 1, 1], [], []>} : vector<8x72xf32>, vector<72x256xf32>, vector<8x256xf32> -> vector<8x256xf32>
    %c0_21 = arith.constant 0 : index
    %c0_22 = arith.constant 0 : index
    %39 = vector.load %arg5[%c0_21, %c0_22] : memref<8x256xf32, #tpu.memory_space<vmem>>, vector<8x256xf32>
    %40 = arith.addf %38, %39 : vector<8x256xf32>
    %cst_23 = arith.constant 0.000000e+00 : f32
    %41 = vector.broadcast %cst_23 : f32 to vector<8x128xf32>
    %42 = tpu.concatenate %41, %40, %41 in 1 : vector<8x128xf32>, vector<8x256xf32>, vector<8x128xf32> -> vector<8x512xf32>
    %43 = vector.extract_strided_slice %42 {offsets = [0, 111], sizes = [8, 256], strides = [1, 1]} : vector<8x512xf32> to vector<8x256xf32>
    %c0_24 = arith.constant 0 : index
    %c0_25 = arith.constant 0 : index
    %c0_26 = arith.constant 0 : index
    %c0_27 = arith.constant 0 : index
    %44 = vector.load %arg3[%c0_24, %c0_25, %c0_26, %c0_27] : memref<3x9x8x256xf32, #tpu.memory_space<vmem>>, vector<1x1x8x256xf32>
    %45 = vector.shape_cast %44 : vector<1x1x8x256xf32> to vector<8x256xf32>
    %46 = arith.mulf %43, %45 : vector<8x256xf32>
    %47 = vector.extract_strided_slice %42 {offsets = [0, 112], sizes = [8, 256], strides = [1, 1]} : vector<8x512xf32> to vector<8x256xf32>
    %c0_28 = arith.constant 0 : index
    %c1_29 = arith.constant 1 : index
    %c0_30 = arith.constant 0 : index
    %c0_31 = arith.constant 0 : index
    %48 = vector.load %arg3[%c0_28, %c1_29, %c0_30, %c0_31] : memref<3x9x8x256xf32, #tpu.memory_space<vmem>>, vector<1x1x8x256xf32>
    %49 = vector.shape_cast %48 : vector<1x1x8x256xf32> to vector<8x256xf32>
    %50 = arith.mulf %47, %49 : vector<8x256xf32>
    %51 = vector.extract_strided_slice %42 {offsets = [0, 113], sizes = [8, 256], strides = [1, 1]} : vector<8x512xf32> to vector<8x256xf32>
    %c0_32 = arith.constant 0 : index
    %c2_33 = arith.constant 2 : index
    %c0_34 = arith.constant 0 : index
    %c0_35 = arith.constant 0 : index
    %52 = vector.load %arg3[%c0_32, %c2_33, %c0_34, %c0_35] : memref<3x9x8x256xf32, #tpu.memory_space<vmem>>, vector<1x1x8x256xf32>
    %53 = vector.shape_cast %52 : vector<1x1x8x256xf32> to vector<8x256xf32>
    %54 = arith.mulf %51, %53 : vector<8x256xf32>
    %55 = vector.extract_strided_slice %42 {offsets = [0, 127], sizes = [8, 256], strides = [1, 1]} : vector<8x512xf32> to vector<8x256xf32>
    %c0_36 = arith.constant 0 : index
    %c3_37 = arith.constant 3 : index
    %c0_38 = arith.constant 0 : index
    %c0_39 = arith.constant 0 : index
    %56 = vector.load %arg3[%c0_36, %c3_37, %c0_38, %c0_39] : memref<3x9x8x256xf32, #tpu.memory_space<vmem>>, vector<1x1x8x256xf32>
    %57 = vector.shape_cast %56 : vector<1x1x8x256xf32> to vector<8x256xf32>
    %58 = arith.mulf %55, %57 : vector<8x256xf32>
    %59 = vector.extract_strided_slice %42 {offsets = [0, 128], sizes = [8, 256], strides = [1, 1]} : vector<8x512xf32> to vector<8x256xf32>
    %60 = vector.extract_strided_slice %42 {offsets = [0, 129], sizes = [8, 256], strides = [1, 1]} : vector<8x512xf32> to vector<8x256xf32>
    %c0_40 = arith.constant 0 : index
    %c5_41 = arith.constant 5 : index
    %c0_42 = arith.constant 0 : index
    %c0_43 = arith.constant 0 : index
    %61 = vector.load %arg3[%c0_40, %c5_41, %c0_42, %c0_43] : memref<3x9x8x256xf32, #tpu.memory_space<vmem>>, vector<1x1x8x256xf32>
    %62 = vector.shape_cast %61 : vector<1x1x8x256xf32> to vector<8x256xf32>
    %63 = arith.mulf %60, %62 : vector<8x256xf32>
    %64 = vector.extract_strided_slice %42 {offsets = [0, 143], sizes = [8, 256], strides = [1, 1]} : vector<8x512xf32> to vector<8x256xf32>
    %c0_44 = arith.constant 0 : index
    %c6_45 = arith.constant 6 : index
    %c0_46 = arith.constant 0 : index
    %c0_47 = arith.constant 0 : index
    %65 = vector.load %arg3[%c0_44, %c6_45, %c0_46, %c0_47] : memref<3x9x8x256xf32, #tpu.memory_space<vmem>>, vector<1x1x8x256xf32>
    %66 = vector.shape_cast %65 : vector<1x1x8x256xf32> to vector<8x256xf32>
    %67 = arith.mulf %64, %66 : vector<8x256xf32>
    %68 = vector.extract_strided_slice %42 {offsets = [0, 144], sizes = [8, 256], strides = [1, 1]} : vector<8x512xf32> to vector<8x256xf32>
    %c0_48 = arith.constant 0 : index
    %c7_49 = arith.constant 7 : index
    %c0_50 = arith.constant 0 : index
    %c0_51 = arith.constant 0 : index
    %69 = vector.load %arg3[%c0_48, %c7_49, %c0_50, %c0_51] : memref<3x9x8x256xf32, #tpu.memory_space<vmem>>, vector<1x1x8x256xf32>
    %70 = vector.shape_cast %69 : vector<1x1x8x256xf32> to vector<8x256xf32>
    %71 = arith.mulf %68, %70 : vector<8x256xf32>
    %72 = vector.extract_strided_slice %42 {offsets = [0, 145], sizes = [8, 256], strides = [1, 1]} : vector<8x512xf32> to vector<8x256xf32>
    %c0_52 = arith.constant 0 : index
    %c8_53 = arith.constant 8 : index
    %c0_54 = arith.constant 0 : index
    %c0_55 = arith.constant 0 : index
    %73 = vector.load %arg3[%c0_52, %c8_53, %c0_54, %c0_55] : memref<3x9x8x256xf32, #tpu.memory_space<vmem>>, vector<1x1x8x256xf32>
    %74 = vector.shape_cast %73 : vector<1x1x8x256xf32> to vector<8x256xf32>
    %75 = arith.mulf %72, %74 : vector<8x256xf32>
    %76 = vector.extract_strided_slice %42 {offsets = [0, 94], sizes = [8, 256], strides = [1, 1]} : vector<8x512xf32> to vector<8x256xf32>
    %c1_56 = arith.constant 1 : index
    %c0_57 = arith.constant 0 : index
    %c0_58 = arith.constant 0 : index
    %c0_59 = arith.constant 0 : index
    %77 = vector.load %arg3[%c1_56, %c0_57, %c0_58, %c0_59] : memref<3x9x8x256xf32, #tpu.memory_space<vmem>>, vector<1x1x8x256xf32>
    %78 = vector.shape_cast %77 : vector<1x1x8x256xf32> to vector<8x256xf32>
    %79 = arith.mulf %76, %78 : vector<8x256xf32>
    %80 = vector.extract_strided_slice %42 {offsets = [0, 96], sizes = [8, 256], strides = [1, 1]} : vector<8x512xf32> to vector<8x256xf32>
    %c1_60 = arith.constant 1 : index
    %c1_61 = arith.constant 1 : index
    %c0_62 = arith.constant 0 : index
    %c0_63 = arith.constant 0 : index
    %81 = vector.load %arg3[%c1_60, %c1_61, %c0_62, %c0_63] : memref<3x9x8x256xf32, #tpu.memory_space<vmem>>, vector<1x1x8x256xf32>
    %82 = vector.shape_cast %81 : vector<1x1x8x256xf32> to vector<8x256xf32>
    %83 = arith.mulf %80, %82 : vector<8x256xf32>
    %84 = vector.extract_strided_slice %42 {offsets = [0, 98], sizes = [8, 256], strides = [1, 1]} : vector<8x512xf32> to vector<8x256xf32>
    %c1_64 = arith.constant 1 : index
    %c2_65 = arith.constant 2 : index
    %c0_66 = arith.constant 0 : index
    %c0_67 = arith.constant 0 : index
    %85 = vector.load %arg3[%c1_64, %c2_65, %c0_66, %c0_67] : memref<3x9x8x256xf32, #tpu.memory_space<vmem>>, vector<1x1x8x256xf32>
    %86 = vector.shape_cast %85 : vector<1x1x8x256xf32> to vector<8x256xf32>
    %87 = arith.mulf %84, %86 : vector<8x256xf32>
    %88 = vector.extract_strided_slice %42 {offsets = [0, 126], sizes = [8, 256], strides = [1, 1]} : vector<8x512xf32> to vector<8x256xf32>
    %c1_68 = arith.constant 1 : index
    %c3_69 = arith.constant 3 : index
    %c0_70 = arith.constant 0 : index
    %c0_71 = arith.constant 0 : index
    %89 = vector.load %arg3[%c1_68, %c3_69, %c0_70, %c0_71] : memref<3x9x8x256xf32, #tpu.memory_space<vmem>>, vector<1x1x8x256xf32>
    %90 = vector.shape_cast %89 : vector<1x1x8x256xf32> to vector<8x256xf32>
    %91 = arith.mulf %88, %90 : vector<8x256xf32>
    %92 = vector.extract_strided_slice %42 {offsets = [0, 128], sizes = [8, 256], strides = [1, 1]} : vector<8x512xf32> to vector<8x256xf32>
    %93 = vector.extract_strided_slice %42 {offsets = [0, 130], sizes = [8, 256], strides = [1, 1]} : vector<8x512xf32> to vector<8x256xf32>
    %c1_72 = arith.constant 1 : index
    %c5_73 = arith.constant 5 : index
    %c0_74 = arith.constant 0 : index
    %c0_75 = arith.constant 0 : index
    %94 = vector.load %arg3[%c1_72, %c5_73, %c0_74, %c0_75] : memref<3x9x8x256xf32, #tpu.memory_space<vmem>>, vector<1x1x8x256xf32>
    %95 = vector.shape_cast %94 : vector<1x1x8x256xf32> to vector<8x256xf32>
    %96 = arith.mulf %93, %95 : vector<8x256xf32>
    %97 = vector.extract_strided_slice %42 {offsets = [0, 158], sizes = [8, 256], strides = [1, 1]} : vector<8x512xf32> to vector<8x256xf32>
    %c1_76 = arith.constant 1 : index
    %c6_77 = arith.constant 6 : index
    %c0_78 = arith.constant 0 : index
    %c0_79 = arith.constant 0 : index
    %98 = vector.load %arg3[%c1_76, %c6_77, %c0_78, %c0_79] : memref<3x9x8x256xf32, #tpu.memory_space<vmem>>, vector<1x1x8x256xf32>
    %99 = vector.shape_cast %98 : vector<1x1x8x256xf32> to vector<8x256xf32>
    %100 = arith.mulf %97, %99 : vector<8x256xf32>
    %101 = vector.extract_strided_slice %42 {offsets = [0, 160], sizes = [8, 256], strides = [1, 1]} : vector<8x512xf32> to vector<8x256xf32>
    %c1_80 = arith.constant 1 : index
    %c7_81 = arith.constant 7 : index
    %c0_82 = arith.constant 0 : index
    %c0_83 = arith.constant 0 : index
    %102 = vector.load %arg3[%c1_80, %c7_81, %c0_82, %c0_83] : memref<3x9x8x256xf32, #tpu.memory_space<vmem>>, vector<1x1x8x256xf32>
    %103 = vector.shape_cast %102 : vector<1x1x8x256xf32> to vector<8x256xf32>
    %104 = arith.mulf %101, %103 : vector<8x256xf32>
    %105 = vector.extract_strided_slice %42 {offsets = [0, 162], sizes = [8, 256], strides = [1, 1]} : vector<8x512xf32> to vector<8x256xf32>
    %c1_84 = arith.constant 1 : index
    %c8_85 = arith.constant 8 : index
    %c0_86 = arith.constant 0 : index
    %c0_87 = arith.constant 0 : index
    %106 = vector.load %arg3[%c1_84, %c8_85, %c0_86, %c0_87] : memref<3x9x8x256xf32, #tpu.memory_space<vmem>>, vector<1x1x8x256xf32>
    %107 = vector.shape_cast %106 : vector<1x1x8x256xf32> to vector<8x256xf32>
    %108 = arith.mulf %105, %107 : vector<8x256xf32>
    %109 = vector.extract_strided_slice %42 {offsets = [0, 77], sizes = [8, 256], strides = [1, 1]} : vector<8x512xf32> to vector<8x256xf32>
    %c2_88 = arith.constant 2 : index
    %c0_89 = arith.constant 0 : index
    %c0_90 = arith.constant 0 : index
    %c0_91 = arith.constant 0 : index
    %110 = vector.load %arg3[%c2_88, %c0_89, %c0_90, %c0_91] : memref<3x9x8x256xf32, #tpu.memory_space<vmem>>, vector<1x1x8x256xf32>
    %111 = vector.shape_cast %110 : vector<1x1x8x256xf32> to vector<8x256xf32>
    %112 = arith.mulf %109, %111 : vector<8x256xf32>
    %113 = vector.extract_strided_slice %42 {offsets = [0, 80], sizes = [8, 256], strides = [1, 1]} : vector<8x512xf32> to vector<8x256xf32>
    %c2_92 = arith.constant 2 : index
    %c1_93 = arith.constant 1 : index
    %c0_94 = arith.constant 0 : index
    %c0_95 = arith.constant 0 : index
    %114 = vector.load %arg3[%c2_92, %c1_93, %c0_94, %c0_95] : memref<3x9x8x256xf32, #tpu.memory_space<vmem>>, vector<1x1x8x256xf32>
    %115 = vector.shape_cast %114 : vector<1x1x8x256xf32> to vector<8x256xf32>
    %116 = arith.mulf %113, %115 : vector<8x256xf32>
    %117 = vector.extract_strided_slice %42 {offsets = [0, 83], sizes = [8, 256], strides = [1, 1]} : vector<8x512xf32> to vector<8x256xf32>
    %c2_96 = arith.constant 2 : index
    %c2_97 = arith.constant 2 : index
    %c0_98 = arith.constant 0 : index
    %c0_99 = arith.constant 0 : index
    %118 = vector.load %arg3[%c2_96, %c2_97, %c0_98, %c0_99] : memref<3x9x8x256xf32, #tpu.memory_space<vmem>>, vector<1x1x8x256xf32>
    %119 = vector.shape_cast %118 : vector<1x1x8x256xf32> to vector<8x256xf32>
    %120 = arith.mulf %117, %119 : vector<8x256xf32>
    %121 = vector.extract_strided_slice %42 {offsets = [0, 125], sizes = [8, 256], strides = [1, 1]} : vector<8x512xf32> to vector<8x256xf32>
    %c2_100 = arith.constant 2 : index
    %c3_101 = arith.constant 3 : index
    %c0_102 = arith.constant 0 : index
    %c0_103 = arith.constant 0 : index
    %122 = vector.load %arg3[%c2_100, %c3_101, %c0_102, %c0_103] : memref<3x9x8x256xf32, #tpu.memory_space<vmem>>, vector<1x1x8x256xf32>
    %123 = vector.shape_cast %122 : vector<1x1x8x256xf32> to vector<8x256xf32>
    %124 = arith.mulf %121, %123 : vector<8x256xf32>
    %125 = vector.extract_strided_slice %42 {offsets = [0, 128], sizes = [8, 256], strides = [1, 1]} : vector<8x512xf32> to vector<8x256xf32>
    %126 = vector.extract_strided_slice %42 {offsets = [0, 131], sizes = [8, 256], strides = [1, 1]} : vector<8x512xf32> to vector<8x256xf32>
    %c2_104 = arith.constant 2 : index
    %c5_105 = arith.constant 5 : index
    %c0_106 = arith.constant 0 : index
    %c0_107 = arith.constant 0 : index
    %127 = vector.load %arg3[%c2_104, %c5_105, %c0_106, %c0_107] : memref<3x9x8x256xf32, #tpu.memory_space<vmem>>, vector<1x1x8x256xf32>
    %128 = vector.shape_cast %127 : vector<1x1x8x256xf32> to vector<8x256xf32>
    %129 = arith.mulf %126, %128 : vector<8x256xf32>
    %130 = vector.extract_strided_slice %42 {offsets = [0, 173], sizes = [8, 256], strides = [1, 1]} : vector<8x512xf32> to vector<8x256xf32>
    %c2_108 = arith.constant 2 : index
    %c6_109 = arith.constant 6 : index
    %c0_110 = arith.constant 0 : index
    %c0_111 = arith.constant 0 : index
    %131 = vector.load %arg3[%c2_108, %c6_109, %c0_110, %c0_111] : memref<3x9x8x256xf32, #tpu.memory_space<vmem>>, vector<1x1x8x256xf32>
    %132 = vector.shape_cast %131 : vector<1x1x8x256xf32> to vector<8x256xf32>
    %133 = arith.mulf %130, %132 : vector<8x256xf32>
    %134 = vector.extract_strided_slice %42 {offsets = [0, 176], sizes = [8, 256], strides = [1, 1]} : vector<8x512xf32> to vector<8x256xf32>
    %c2_112 = arith.constant 2 : index
    %c7_113 = arith.constant 7 : index
    %c0_114 = arith.constant 0 : index
    %c0_115 = arith.constant 0 : index
    %135 = vector.load %arg3[%c2_112, %c7_113, %c0_114, %c0_115] : memref<3x9x8x256xf32, #tpu.memory_space<vmem>>, vector<1x1x8x256xf32>
    %136 = vector.shape_cast %135 : vector<1x1x8x256xf32> to vector<8x256xf32>
    %137 = arith.mulf %134, %136 : vector<8x256xf32>
    %138 = vector.extract_strided_slice %42 {offsets = [0, 179], sizes = [8, 256], strides = [1, 1]} : vector<8x512xf32> to vector<8x256xf32>
    %c2_116 = arith.constant 2 : index
    %c8_117 = arith.constant 8 : index
    %c0_118 = arith.constant 0 : index
    %c0_119 = arith.constant 0 : index
    %139 = vector.load %arg3[%c2_116, %c8_117, %c0_118, %c0_119] : memref<3x9x8x256xf32, #tpu.memory_space<vmem>>, vector<1x1x8x256xf32>
    %140 = vector.shape_cast %139 : vector<1x1x8x256xf32> to vector<8x256xf32>
    %141 = arith.mulf %138, %140 : vector<8x256xf32>
    %142 = tpu.concatenate %46, %50, %54, %58, %59, %63, %67, %71, %75, %79, %83, %87, %91, %92, %96, %100 in 0 : vector<8x256xf32>, vector<8x256xf32>, vector<8x256xf32>, vector<8x256xf32>, vector<8x256xf32>, vector<8x256xf32>, vector<8x256xf32>, vector<8x256xf32>, vector<8x256xf32>, vector<8x256xf32>, vector<8x256xf32>, vector<8x256xf32>, vector<8x256xf32>, vector<8x256xf32>, vector<8x256xf32>, vector<8x256xf32> -> vector<128x256xf32>
    %143 = tpu.concatenate %104, %108, %112, %116, %120, %124, %125, %129, %133, %137, %141, %40 in 0 : vector<8x256xf32>, vector<8x256xf32>, vector<8x256xf32>, vector<8x256xf32>, vector<8x256xf32>, vector<8x256xf32>, vector<8x256xf32>, vector<8x256xf32>, vector<8x256xf32>, vector<8x256xf32>, vector<8x256xf32>, vector<8x256xf32> -> vector<96x256xf32>
    %144 = tpu.concatenate %142, %143 in 0 : vector<128x256xf32>, vector<96x256xf32> -> vector<224x256xf32>
    %c0_120 = arith.constant 0 : index
    %c0_121 = arith.constant 0 : index
    %145 = vector.load %arg6[%c0_120, %c0_121] : memref<32x224xf32, #tpu.memory_space<vmem>>, vector<32x224xf32>
    %cst_122 = arith.constant dense<0.000000e+00> : vector<32x256xf32>
    %146 = tpu.matmul %145, %144, %cst_122 {dimension_numbers = #tpu.dot_dimension_numbers<[1], [0], [0], [1], [0, 0, 1, 1], [], []>} : vector<32x224xf32>, vector<224x256xf32>, vector<32x256xf32> -> vector<32x256xf32>
    %c0_123 = arith.constant 0 : index
    %c0_124 = arith.constant 0 : index
    %147 = vector.load %arg7[%c0_123, %c0_124] : memref<32x256xf32, #tpu.memory_space<vmem>>, vector<32x256xf32>
    %148 = arith.addf %146, %147 : vector<32x256xf32>
    %c0_125 = arith.constant 0 : index
    %c0_126 = arith.constant 0 : index
    %149 = vector.load %arg8[%c0_125, %c0_126] : memref<32x256xf32, #tpu.memory_space<vmem>>, vector<32x256xf32>
    tpu.vector_store %arg8[%c0_125, %c0_126], %148 {strides = array<i32>} : memref<32x256xf32, #tpu.memory_space<vmem>>, vector<32x256xf32>,
    return
  }
  func.func @transform_0(%arg0: i32) -> (i32, i32) {
    %c0_i32 = arith.constant 0 : i32
    %c0_i32_0 = arith.constant 0 : i32
    return %arg0, %c0_i32 : i32, i32
  }
  func.func @transform_1(%arg0: i32) -> (i32, i32, i32) {
    %c0_i32 = arith.constant 0 : i32
    %c0_i32_0 = arith.constant 0 : i32
    %c0_i32_1 = arith.constant 0 : i32
    %c0_i32_2 = arith.constant 0 : i32
    return %c0_i32, %c0_i32_0, %c0_i32_1 : i32, i32, i32
  }
  func.func @transform_2(%arg0: i32) -> (i32, i32, i32, i32) {
    %c0_i32 = arith.constant 0 : i32
    %c0_i32_0 = arith.constant 0 : i32
    %c0_i32_1 = arith.constant 0 : i32
    %c0_i32_2 = arith.constant 0 : i32
    %c0_i32_3 = arith.constant 0 : i32
    return %c0_i32, %c0_i32_0, %c0_i32_1, %c0_i32_2 : i32, i32, i32, i32
  }
  func.func @transform_3(%arg0: i32) -> (i32, i32) {
    %c0_i32 = arith.constant 0 : i32
    %c0_i32_0 = arith.constant 0 : i32
    %c0_i32_1 = arith.constant 0 : i32
    return %c0_i32, %c0_i32_0 : i32, i32
  }
  func.func @transform_4(%arg0: i32) -> (i32, i32) {
    %c0_i32 = arith.constant 0 : i32
    %c0_i32_0 = arith.constant 0 : i32
    %c0_i32_1 = arith.constant 0 : i32
    return %c0_i32, %c0_i32_0 : i32, i32
  }
  func.func @transform_5(%arg0: i32) -> (i32, i32) {
    %c0_i32 = arith.constant 0 : i32
    %c0_i32_0 = arith.constant 0 : i32
    %c0_i32_1 = arith.constant 0 : i32
    return %c0_i32, %c0_i32_0 : i32, i32
  }
  func.func @transform_6(%arg0: i32) -> (i32, i32) {
    %c0_i32 = arith.constant 0 : i32
    %c0_i32_0 = arith.constant 0 : i32
    %c0_i32_1 = arith.constant 0 : i32
    return %c0_i32, %c0_i32_0 : i32, i32
  }
  func.func @transform_7(%arg0: i32) -> (i32, i32) {
    %c0_i32 = arith.constant 0 : i32
    %c0_i32_0 = arith.constant 0 : i32
    return %arg0, %c0_i32 : i32, i32
  }
}

</mosaic_0001>

<llo_original>
// kernel: tile.18
$region0: #{tile.18}
  #allocation0 [shape = 's32[1]{0}', space=sflag, size = 0x4, scoped, tag = 'scoped memory for tile.18']
  %s0 = inlined_call_operand.vmem [shape: f32[16], index: 0, kind: input, shape index: {}]
  %s1 = inlined_call_operand.vmem [shape: f32[2,16], index: 1, kind: output, shape index: {}]
  // Predicated region
  $region2: #{tile.18} parent=0 // pred_check
    _
  $region3: #{tile.18} parent=0 // pred_check_branch
    %3 = sbr.rel (0) target = $region5
  $region4: #{tile.18} parent=0 // pred_region
    _
  $region5: #{tile.18} parent=0 // pred_fallthru
    _
  %v4 = vld [vmem:[%s0] ss:$0 sm:$0xff]
  %5 = vst [vmem:[%s1] sm:$0x3] %v4

// kernel: tile.13
$region0: #{tile.13}
  #allocation0 [shape = 's32[1]{0}', space=sflag, size = 0x4, scoped, tag = 'scoped memory for tile.13']
  %s0 = inlined_call_operand.vmem [shape: f32[4], index: 0, kind: input, shape index: {}]
  %s1 = inlined_call_operand.vmem [shape: f32[2,4], index: 1, kind: output, shape index: {}]
  // Predicated region
  $region2: #{tile.13} parent=0 // pred_check
    _
  $region3: #{tile.13} parent=0 // pred_check_branch
    %3 = sbr.rel (0) target = $region5
  $region4: #{tile.13} parent=0 // pred_region
    _
  $region5: #{tile.13} parent=0 // pred_fallthru
    _
  %v4 = vld [vmem:[%s0] ss:$0 sm:$0xff]
  %5 = vst [vmem:[%s1] sm:$0x3] %v4

// kernel: c3_block.1
$region0: #{c3_block.1}
  #allocation0 [shape = 'u32[]', space=smem, size = 0x4, offset = 0x4, fixed_abs, tag = 'smem constant byte address 0x4 - core index']
  #allocation1 [shape = 'u32[144,128]{1,0:T(1,128)}', space=vmem, size = 0x12000, scoped, tag = 'internal scratch']
  %s0 = inlined_call_operand.vmem [shape: f32[8,256], index: 0, kind: input, shape index: {}]
  %s1 = inlined_call_operand.vmem [shape: f32[9,8,256], index: 1, kind: input, shape index: {}]
  %s2 = inlined_call_operand.vmem [shape: f32[3,9,8,256], index: 2, kind: input, shape index: {}]
  %s3 = inlined_call_operand.vmem [shape: f32[8,72], index: 3, kind: input, shape index: {}]
  %s4 = inlined_call_operand.vmem [shape: f32[8,256], index: 4, kind: input, shape index: {}]
  %s5 = inlined_call_operand.vmem [shape: f32[32,224], index: 5, kind: input, shape index: {}]
  %s6 = inlined_call_operand.vmem [shape: f32[32,256], index: 6, kind: input, shape index: {}]
  %s7 = inlined_call_operand.vmem [shape: f32[32,256], index: 7, kind: output, shape index: {}]
  %s8 = sld [smem:[#allocation0]]
  $region38: #{c3_block.1} parent=0
    _
  %s10 = ssub.s32 1, %s8
  %s11 = scalar_select 0, %s10, %s8
  // Predicated region
  $region2: #{c3_block.1} parent=0 // pred_check
    _
  $region3: #{c3_block.1} parent=0 // pred_check_branch
    %13 = sbr.rel (0) target = $region5
  $region4: #{c3_block.1} parent=0 // pred_region
    _
  $region5: #{c3_block.1} parent=0 // pred_fallthru
    _
  // Predicated region
  $region6: #{c3_block.1} parent=0 // pred_check
    _
  $region7: #{c3_block.1} parent=0 // pred_check_branch
    %15 = sbr.rel (0) target = $region9
  $region8: #{c3_block.1} parent=0 // pred_region
    _
  $region9: #{c3_block.1} parent=0 // pred_fallthru
    _
  // Predicated region
  $region10: #{c3_block.1} parent=0 // pred_check
    _
  $region11: #{c3_block.1} parent=0 // pred_check_branch
    %17 = sbr.rel (0) target = $region13
  $region12: #{c3_block.1} parent=0 // pred_region
    _
  $region13: #{c3_block.1} parent=0 // pred_fallthru
    _
  // Predicated region
  $region14: #{c3_block.1} parent=0 // pred_check
    _
  $region15: #{c3_block.1} parent=0 // pred_check_branch
    %19 = sbr.rel (0) target = $region17
  $region16: #{c3_block.1} parent=0 // pred_region
    _
  $region17: #{c3_block.1} parent=0 // pred_fallthru
    _
  // Predicated region
  $region18: #{c3_block.1} parent=0 // pred_check
    _
  $region19: #{c3_block.1} parent=0 // pred_check_branch
    %21 = sbr.rel (0) target = $region21
  $region20: #{c3_block.1} parent=0 // pred_region
    _
  $region21: #{c3_block.1} parent=0 // pred_fallthru
    _
  // Predicated region
  $region22: #{c3_block.1} parent=0 // pred_check
    _
  $region23: #{c3_block.1} parent=0 // pred_check_branch
    %23 = sbr.rel (0) target = $region25
  $region24: #{c3_block.1} parent=0 // pred_region
    _
  $region25: #{c3_block.1} parent=0 // pred_fallthru
    _
  // Predicated region
  $region26: #{c3_block.1} parent=0 // pred_check
    _
  $region27: #{c3_block.1} parent=0 // pred_check_branch
    %25 = sbr.rel (0) target = $region29
  $region28: #{c3_block.1} parent=0 // pred_region
    _
  $region29: #{c3_block.1} parent=0 // pred_fallthru
    _
  %v26 = vld [vmem:[%s0] sm:$0xff]
  %v27 = vld [vmem:[%s0 + $0x8] sm:$0xff]
  %v28 = vld [vmem:[%s1] sm:$0xff]
  %v29 = vld [vmem:[%s1 + $0x8] sm:$0xff]
  %32 = vrot.lane.b32.xlu0 %v28, 111
  %v33 = vpop.permute.xlu0 %32
  %34 = vrot.lane.b32.xlu0 %v29, 111
  %v35 = vpop.permute.xlu0 %34
  %vm36 = vcmask 908288
  %v37 = vsel %vm36, %v33, %v35
  %v41 = vmul.f32 %v33, 0.0
  %v42 = vmul.f32 %v26, %v37
  %v43 = vmul.f32 %v27, %v35
  %s44 = scalar_lea.vmem %s1, 16
  %v45 = vld [vmem:[%s44] sm:$0xff]
  %v46 = vld [vmem:[%s44 + $0x8] sm:$0xff]
  %49 = vrot.lane.b32.xlu0 %v45, 112
  %v50 = vpop.permute.xlu0 %49
  %51 = vrot.lane.b32.xlu0 %v46, 112
  %v52 = vpop.permute.xlu0 %51
  %vm53 = vcmask 916480
  %v54 = vsel %vm53, %v50, %v52
  %v58 = vmul.f32 %v50, 0.0
  %v59 = vmul.f32 %v26, %v54
  %v60 = vmul.f32 %v27, %v52
  %s61 = scalar_lea.vmem %s1, 32
  %v62 = vld [vmem:[%s61] sm:$0xff]
  %v63 = vld [vmem:[%s61 + $0x8] sm:$0xff]
  %66 = vrot.lane.b32.xlu0 %v62, 113
  %v67 = vpop.permute.xlu0 %66
  %68 = vrot.lane.b32.xlu0 %v63, 113
  %v69 = vpop.permute.xlu0 %68
  %vm70 = vcmask 924672
  %v71 = vsel %vm70, %v67, %v69
  %v75 = vmul.f32 %v67, 0.0
  %v76 = vmul.f32 %v26, %v71
  %v77 = vmul.f32 %v27, %v69
  %s78 = scalar_lea.vmem %s1, 48
  %v79 = vld [vmem:[%s78] sm:$0xff]
  %v80 = vld [vmem:[%s78 + $0x8] sm:$0xff]
  %83 = vrot.lane.b32.xlu0 %v79, 127
  %v84 = vpop.permute.xlu0 %83
  %85 = vrot.lane.b32.xlu0 %v80, 127
  %v86 = vpop.permute.xlu0 %85
  %vm87 = vcmask 1039360
  %v88 = vsel %vm87, %v84, %v86
  %v92 = vmul.f32 %v84, 0.0
  %v93 = vmul.f32 %v26, %v88
  %v94 = vmul.f32 %v27, %v86
  %s95 = scalar_lea.vmem %s1, 80
  %v96 = vld [vmem:[%s95] sm:$0xff]
  %v97 = vld [vmem:[%s95 + $0x8] sm:$0xff]
  %100 = vrot.lane.b32.xlu0 %v96, 1
  %v101 = vpop.permute.xlu0 %100
  %102 = vrot.lane.b32.xlu0 %v97, 1
  %v103 = vpop.permute.xlu0 %102
  %vm104 = vcmask 7168
  %v105 = vsel %vm104, %v101, %v103
  %v109 = vmul.f32 %v26, %v101
  %v110 = vmul.f32 %v27, %v105
  %v111 = vmul.f32 %v103, 0.0
  %s112 = scalar_lea.vmem %s1, 96
  %v113 = vld [vmem:[%s112] sm:$0xff]
  %v114 = vld [vmem:[%s112 + $0x8] sm:$0xff]
  %117 = vrot.lane.b32.xlu0 %v113, 15
  %v118 = vpop.permute.xlu0 %117
  %119 = vrot.lane.b32.xlu0 %v114, 15
  %v120 = vpop.permute.xlu0 %119
  %vm121 = vcmask 121856
  %v122 = vsel %vm121, %v118, %v120
  %v126 = vmul.f32 %v26, %v118
  %v127 = vmul.f32 %v27, %v122
  %v128 = vmul.f32 %v120, 0.0
  %s129 = scalar_lea.vmem %s1, 112
  %v130 = vld [vmem:[%s129] sm:$0xff]
  %v131 = vld [vmem:[%s129 + $0x8] sm:$0xff]
  %134 = vrot.lane.b32.xlu0 %v130, 16
  %v135 = vpop.permute.xlu0 %134
  %136 = vrot.lane.b32.xlu0 %v131, 16
  %v137 = vpop.permute.xlu0 %136
  %vm138 = vcmask 130048
  %v139 = vsel %vm138, %v135, %v137
  %v143 = vmul.f32 %v26, %v135
  %v144 = vmul.f32 %v27, %v139
  %v145 = vmul.f32 %v137, 0.0
  %s146 = scalar_lea.vmem %s1, 128
  %v147 = vld [vmem:[%s146] sm:$0xff]
  %v148 = vld [vmem:[%s146 + $0x8] sm:$0xff]
  %151 = vrot.lane.b32.xlu0 %v147, 17
  %v152 = vpop.permute.xlu0 %151
  %153 = vrot.lane.b32.xlu0 %v148, 17
  %v154 = vpop.permute.xlu0 %153
  %vm155 = vcmask 138240
  %v156 = vsel %vm155, %v152, %v154
  %v160 = vmul.f32 %v26, %v152
  %v161 = vmul.f32 %v27, %v156
  %v162 = vmul.f32 %v154, 0.0
  %166 = vrot.lane.b32.xlu0 %v58, 127
  %v167 = vpop.permute.xlu0 %166
  %168 = vrot.lane.b32.xlu0 %v59, 127
  %v169 = vpop.permute.xlu0 %168
  %170 = vrot.lane.b32.xlu0 %v60, 127
  %v171 = vpop.permute.xlu0 %170
  %v172 = vsel %vm87, %v167, %v169
  %v173 = vsel %vm87, %v169, %v171
  %177 = vrot.lane.b32.xlu0 %v75, 126
  %v178 = vpop.permute.xlu0 %177
  %179 = vrot.lane.b32.xlu0 %v76, 126
  %v180 = vpop.permute.xlu0 %179
  %181 = vrot.lane.b32.xlu0 %v77, 126
  %v182 = vpop.permute.xlu0 %181
  %vm183 = vcmask 1031168
  %v184 = vsel %vm183, %v178, %v180
  %v185 = vsel %vm183, %v180, %v182
  %189 = vrot.lane.b32.xlu0 %v92, 112
  %v190 = vpop.permute.xlu0 %189
  %191 = vrot.lane.b32.xlu0 %v93, 112
  %v192 = vpop.permute.xlu0 %191
  %193 = vrot.lane.b32.xlu0 %v94, 112
  %v194 = vpop.permute.xlu0 %193
  %v195 = vsel %vm53, %v190, %v192
  %v196 = vsel %vm53, %v192, %v194
  %199 = vrot.lane.b32.xlu0 %v26, 111
  %v200 = vpop.permute.xlu0 %199
  %201 = vrot.lane.b32.xlu0 %v27, 111
  %v202 = vpop.permute.xlu0 %201
  %v203 = vsel %vm36, %v200, %v202
  %207 = vrot.lane.b32.xlu0 %v109, 110
  %v208 = vpop.permute.xlu0 %207
  %209 = vrot.lane.b32.xlu0 %v110, 110
  %v210 = vpop.permute.xlu0 %209
  %211 = vrot.lane.b32.xlu0 %v111, 110
  %v212 = vpop.permute.xlu0 %211
  %vm213 = vcmask 900096
  %v214 = vsel %vm213, %v208, %v210
  %v215 = vsel %vm213, %v210, %v212
  %219 = vrot.lane.b32.xlu0 %v126, 96
  %v220 = vpop.permute.xlu0 %219
  %221 = vrot.lane.b32.xlu0 %v127, 96
  %v222 = vpop.permute.xlu0 %221
  %223 = vrot.lane.b32.xlu0 %v128, 96
  %v224 = vpop.permute.xlu0 %223
  %vm225 = vcmask 785408
  %v226 = vsel %vm225, %v220, %v222
  %v227 = vsel %vm225, %v222, %v224
  %231 = vrot.lane.b32.xlu0 %v143, 95
  %v232 = vpop.permute.xlu0 %231
  %233 = vrot.lane.b32.xlu0 %v144, 95
  %v234 = vpop.permute.xlu0 %233
  %235 = vrot.lane.b32.xlu0 %v145, 95
  %v236 = vpop.permute.xlu0 %235
  %vm237 = vcmask 777216
  %v238 = vsel %vm237, %v232, %v234
  %v239 = vsel %vm237, %v234, %v236
  %243 = vrot.lane.b32.xlu0 %v160, 94
  %v244 = vpop.permute.xlu0 %243
  %245 = vrot.lane.b32.xlu0 %v161, 94
  %v246 = vpop.permute.xlu0 %245
  %247 = vrot.lane.b32.xlu0 %v162, 94
  %v248 = vpop.permute.xlu0 %247
  %vm249 = vcmask 769024
  %v250 = vsel %vm249, %v244, %v246
  %v251 = vsel %vm249, %v246, %v248
  %v252 = vld [vmem:[%s3] sm:$0xff]
  %v253 = vld [vmem:[%s4] sm:$0xff]
  %v254 = vld [vmem:[%s4 + $0x8] sm:$0xff]
  %258 = vrot.lane.b32.xlu0 %v41, 17
  %v259 = vpop.permute.xlu0 %258
  %260 = vrot.lane.b32.xlu0 %v42, 17
  %v261 = vpop.permute.xlu0 %260
  %262 = vrot.lane.b32.xlu0 %v43, 17
  %v263 = vpop.permute.xlu0 %262
  %264 = vrot.lane.b32.xlu0 %v172, 17
  %v265 = vpop.permute.xlu0 %264
  %266 = vrot.lane.b32.xlu0 %v173, 17
  %v267 = vpop.permute.xlu0 %266
  %268 = vrot.lane.b32.xlu0 %v171, 17
  %v269 = vpop.permute.xlu0 %268
  %270 = vrot.lane.b32.xlu0 %v184, 17
  %v271 = vpop.permute.xlu0 %270
  %272 = vrot.lane.b32.xlu0 %v185, 17
  %v273 = vpop.permute.xlu0 %272
  %274 = vrot.lane.b32.xlu0 %v182, 17
  %v275 = vpop.permute.xlu0 %274
  %276 = vrot.lane.b32.xlu0 %v195, 17
  %v277 = vpop.permute.xlu0 %276
  %278 = vrot.lane.b32.xlu0 %v196, 17
  %v279 = vpop.permute.xlu0 %278
  %280 = vrot.lane.b32.xlu0 %v194, 17
  %v281 = vpop.permute.xlu0 %280
  %282 = vrot.lane.b32.xlu0 %v200, 17
  %v283 = vpop.permute.xlu0 %282
  %284 = vrot.lane.b32.xlu0 %v203, 17
  %v285 = vpop.permute.xlu0 %284
  %286 = vrot.lane.b32.xlu0 %v202, 17
  %v287 = vpop.permute.xlu0 %286
  %288 = vrot.lane.b32.xlu0 %v208, 17
  %v289 = vpop.permute.xlu0 %288
  %290 = vrot.lane.b32.xlu0 %v214, 17
  %v291 = vpop.permute.xlu0 %290
  %292 = vrot.lane.b32.xlu0 %v215, 17
  %v293 = vpop.permute.xlu0 %292
  %294 = vrot.lane.b32.xlu0 %v220, 17
  %v295 = vpop.permute.xlu0 %294
  %296 = vrot.lane.b32.xlu0 %v226, 17
  %v297 = vpop.permute.xlu0 %296
  %298 = vrot.lane.b32.xlu0 %v227, 17
  %v299 = vpop.permute.xlu0 %298
  %300 = vrot.lane.b32.xlu0 %v232, 17
  %v301 = vpop.permute.xlu0 %300
  %302 = vrot.lane.b32.xlu0 %v238, 17
  %v303 = vpop.permute.xlu0 %302
  %304 = vrot.lane.b32.xlu0 %v239, 17
  %v305 = vpop.permute.xlu0 %304
  %306 = vrot.lane.b32.xlu0 %v244, 17
  %v307 = vpop.permute.xlu0 %306
  %308 = vrot.lane.b32.xlu0 %v250, 17
  %v309 = vpop.permute.xlu0 %308
  %310 = vrot.lane.b32.xlu0 %v251, 17
  %v311 = vpop.permute.xlu0 %310
  %v312 = vsel %vm155, %v259, %v261
  %v313 = vsel %vm155, %v261, %v263
  %v314 = vsel %vm155, %v265, %v267
  %v315 = vsel %vm155, %v267, %v269
  %v316 = vsel %vm155, %v271, %v273
  %v317 = vsel %vm155, %v273, %v275
  %v318 = vsel %vm155, %v277, %v279
  %v319 = vsel %vm155, %v279, %v281
  %v320 = vsel %vm155, %v283, %v285
  %v321 = vsel %vm155, %v285, %v287
  %v322 = vsel %vm155, %v289, %v291
  %v323 = vsel %vm155, %v291, %v293
  %v324 = vsel %vm155, %v295, %v297
  %v325 = vsel %vm155, %v297, %v299
  %v326 = vsel %vm155, %v301, %v303
  %v327 = vsel %vm155, %v303, %v305
  %v328 = vsel %vm155, %v307, %v309
  %v329 = vsel %vm155, %v309, %v311
  %vm348 = vcmask 588800
  %v350 = vsel %vm348, %v252, 0
  %352 = vmatprep.subr.mxu0 %v313
  %353 = vmatpush1.msra.mxu0 %v312
  %354 = vmatprep.subr.mxu0 %v315
  %355 = vmatpush1.msra.mxu0 %v314
  %356 = vmatprep.subr.mxu0 %v317
  %357 = vmatpush1.msra.mxu0 %v316
  %358 = vmatprep.subr.mxu0 %v319
  %359 = vmatpush1.msra.mxu0 %v318
  %360 = vmatprep.subr.mxu0 %v321
  %361 = vmatpush1.msra.mxu0 %v320
  %362 = vmatprep.subr.mxu0 %v323
  %363 = vmatpush1.msra.mxu0 %v322
  %364 = vmatprep.subr.mxu0 %v325
  %365 = vmatpush1.msra.mxu0 %v324
  %366 = vmatprep.subr.mxu0 %v327
  %367 = vmatpush1.msra.mxu0 %v326
  %368 = vmatprep.subr.mxu0 %v329
  %369 = vmatpush1.msra.mxu0 %v328
  %370 = vmatprep.subr.mxu0 0.0
  %371 = vmatpush1.msra.mxu0 0.0
  %372 = vmatprep.subr.mxu0 0.0
  %373 = vmatpush1.msra.mxu0 0.0
  %374 = vmatprep.subr.mxu0 0.0
  %375 = vmatpush1.msra.mxu0 0.0
  %376 = vmatprep.subr.mxu0 0.0
  %377 = vmatpush1.msra.mxu0 0.0
  %378 = vmatprep.subr.mxu0 0.0
  %379 = vmatpush1.msra.mxu0 0.0
  %380 = vmatprep.subr.mxu0 0.0
  %381 = vmatpush1.msra.mxu0 0.0
  %382 = vmatprep.subr.mxu0 0.0
  %383 = vmatpush1.msra.mxu0 0.0
  %384 = vmatprep.subr.mxu0 0.0
  %385 = vmatpush1.msra.mxu0 0.0
  %386 = vmatprep.subr.mxu0 0.0
  %387 = vmatpush1.msra.mxu0 0.0
  %388 = vmatprep.subr.mxu0 0.0
  %389 = vmatpush1.msra.mxu0 0.0
  %390 = vmatprep.subr.mxu0 0.0
  %391 = vmatpush1.msra.mxu0 0.0
  %392 = vmatprep.subr.mxu0 0.0
  %393 = vmatpush1.msra.mxu0 0.0
  %394 = vmatprep.subr.mxu0 0.0
  %395 = vmatpush1.msra.mxu0 0.0
  %396 = vmatprep.subr.mxu0 0.0
  %397 = vmatpush1.msra.mxu0 0.0
  %398 = vmatprep.subr.mxu0 0.0
  %399 = vmatpush1.msra.mxu0 0.0
  %400 = vmatprep.subr.mxu0 0.0
  %401 = vmatpush1.msra.mxu0 0.0
  %402 = vmatprep.subr.mxu0 0.0
  %403 = vmatpush1.msra.mxu0 0.0
  %404 = vmatprep.subr.mxu0 0.0
  %405 = vmatpush1.msra.mxu0 0.0
  %406 = vmatprep.subr.mxu0 0.0
  %407 = vmatpush1.msra.mxu0 0.0
  %408 = vmatprep.subr.mxu0 0.0
  %409 = vmatpush1.msra.mxu0 0.0
  %410 = vmatprep.subr.mxu0 0.0
  %411 = vmatpush1.msra.mxu0 0.0
  %412 = vmatprep.subr.mxu0 0.0
  %413 = vmatpush1.msra.mxu0 0.0
  %414 = vmatprep.subr.mxu0 0.0
  %415 = vmatpush1.msra.mxu0 0.0
  %416 = vmatprep.mubr.f32.mxu0 0.0
  %417 = vmatmul.mubr.f32.gmra.mrb[0].mxu0 %v350
  %v418 = vpop.f32.mrb[0].mxu0
  %v419 = vadd.f32 %v253, %v418
  %v420 = vpop.f32.mrb[0].mxu0
  %v421 = vadd.f32 %v254, %v420
  %422 = vdwg.mxu0
  %v423 = vld [vmem:[%s2] sm:$0xff]
  %v424 = vld [vmem:[%s2 + $0x8] sm:$0xff]
  %427 = vrot.lane.b32.xlu0 %v423, 111
  %v428 = vpop.permute.xlu0 %427
  %429 = vrot.lane.b32.xlu0 %v424, 111
  %v430 = vpop.permute.xlu0 %429
  %v431 = vsel %vm36, %v428, %v430
  %v435 = vmul.f32 %v428, 0.0
  %v436 = vmul.f32 %v419, %v431
  %v437 = vmul.f32 %v421, %v430
  %s438 = scalar_lea.vmem %s2, 16
  %v439 = vld [vmem:[%s438] sm:$0xff]
  %v440 = vld [vmem:[%s438 + $0x8] sm:$0xff]
  %443 = vrot.lane.b32.xlu0 %v439, 112
  %v444 = vpop.permute.xlu0 %443
  %445 = vrot.lane.b32.xlu0 %v440, 112
  %v446 = vpop.permute.xlu0 %445
  %v447 = vsel %vm53, %v444, %v446
  %v451 = vmul.f32 %v444, 0.0
  %v452 = vmul.f32 %v419, %v447
  %v453 = vmul.f32 %v421, %v446
  %s454 = scalar_lea.vmem %s2, 32
  %v455 = vld [vmem:[%s454] sm:$0xff]
  %v456 = vld [vmem:[%s454 + $0x8] sm:$0xff]
  %459 = vrot.lane.b32.xlu0 %v455, 113
  %v460 = vpop.permute.xlu0 %459
  %461 = vrot.lane.b32.xlu0 %v456, 113
  %v462 = vpop.permute.xlu0 %461
  %v463 = vsel %vm70, %v460, %v462
  %v467 = vmul.f32 %v460, 0.0
  %v468 = vmul.f32 %v419, %v463
  %v469 = vmul.f32 %v421, %v462
  %s470 = scalar_lea.vmem %s2, 48
  %v471 = vld [vmem:[%s470] sm:$0xff]
  %v472 = vld [vmem:[%s470 + $0x8] sm:$0xff]
  %475 = vrot.lane.b32.xlu0 %v471, 127
  %v476 = vpop.permute.xlu0 %475
  %477 = vrot.lane.b32.xlu0 %v472, 127
  %v478 = vpop.permute.xlu0 %477
  %v479 = vsel %vm87, %v476, %v478
  %v483 = vmul.f32 %v476, 0.0
  %v484 = vmul.f32 %v419, %v479
  %v485 = vmul.f32 %v421, %v478
  %s486 = scalar_lea.vmem %s2, 80
  %v487 = vld [vmem:[%s486] sm:$0xff]
  %v488 = vld [vmem:[%s486 + $0x8] sm:$0xff]
  %491 = vrot.lane.b32.xlu0 %v487, 1
  %v492 = vpop.permute.xlu0 %491
  %493 = vrot.lane.b32.xlu0 %v488, 1
  %v494 = vpop.permute.xlu0 %493
  %v495 = vsel %vm104, %v492, %v494
  %v499 = vmul.f32 %v419, %v492
  %v500 = vmul.f32 %v421, %v495
  %v501 = vmul.f32 %v494, 0.0
  %s502 = scalar_lea.vmem %s2, 96
  %v503 = vld [vmem:[%s502] sm:$0xff]
  %v504 = vld [vmem:[%s502 + $0x8] sm:$0xff]
  %507 = vrot.lane.b32.xlu0 %v503, 15
  %v508 = vpop.permute.xlu0 %507
  %509 = vrot.lane.b32.xlu0 %v504, 15
  %v510 = vpop.permute.xlu0 %509
  %v511 = vsel %vm121, %v508, %v510
  %v515 = vmul.f32 %v419, %v508
  %v516 = vmul.f32 %v421, %v511
  %v517 = vmul.f32 %v510, 0.0
  %s518 = scalar_lea.vmem %s2, 112
  %v519 = vld [vmem:[%s518] sm:$0xff]
  %v520 = vld [vmem:[%s518 + $0x8] sm:$0xff]
  %523 = vrot.lane.b32.xlu0 %v519, 16
  %v524 = vpop.permute.xlu0 %523
  %525 = vrot.lane.b32.xlu0 %v520, 16
  %v526 = vpop.permute.xlu0 %525
  %v527 = vsel %vm138, %v524, %v526
  %v531 = vmul.f32 %v419, %v524
  %v532 = vmul.f32 %v421, %v527
  %v533 = vmul.f32 %v526, 0.0
  %s534 = scalar_lea.vmem %s2, 128
  %v535 = vld [vmem:[%s534] sm:$0xff]
  %v536 = vld [vmem:[%s534 + $0x8] sm:$0xff]
  %539 = vrot.lane.b32.xlu0 %v535, 17
  %v540 = vpop.permute.xlu0 %539
  %541 = vrot.lane.b32.xlu0 %v536, 17
  %v542 = vpop.permute.xlu0 %541
  %v543 = vsel %vm155, %v540, %v542
  %v547 = vmul.f32 %v419, %v540
  %v548 = vmul.f32 %v421, %v543
  %v549 = vmul.f32 %v542, 0.0
  %s550 = scalar_lea.vmem %s2, 144
  %v551 = vld [vmem:[%s550] sm:$0xff]
  %v552 = vld [vmem:[%s550 + $0x8] sm:$0xff]
  %555 = vrot.lane.b32.xlu0 %v551, 94
  %v556 = vpop.permute.xlu0 %555
  %557 = vrot.lane.b32.xlu0 %v552, 94
  %v558 = vpop.permute.xlu0 %557
  %v559 = vsel %vm249, %v556, %v558
  %v563 = vmul.f32 %v556, 0.0
  %v564 = vmul.f32 %v419, %v559
  %v565 = vmul.f32 %v421, %v558
  %s566 = scalar_lea.vmem %s2, 160
  %v567 = vld [vmem:[%s566] sm:$0xff]
  %v568 = vld [vmem:[%s566 + $0x8] sm:$0xff]
  %571 = vrot.lane.b32.xlu0 %v567, 96
  %v572 = vpop.permute.xlu0 %571
  %573 = vrot.lane.b32.xlu0 %v568, 96
  %v574 = vpop.permute.xlu0 %573
  %v575 = vsel %vm225, %v572, %v574
  %v579 = vmul.f32 %v572, 0.0
  %v580 = vmul.f32 %v419, %v575
  %v581 = vmul.f32 %v421, %v574
  %s582 = scalar_lea.vmem %s2, 176
  %v583 = vld [vmem:[%s582] sm:$0xff]
  %v584 = vld [vmem:[%s582 + $0x8] sm:$0xff]
  %587 = vrot.lane.b32.xlu0 %v583, 98
  %v588 = vpop.permute.xlu0 %587
  %589 = vrot.lane.b32.xlu0 %v584, 98
  %v590 = vpop.permute.xlu0 %589
  %vm591 = vcmask 801792
  %v592 = vsel %vm591, %v588, %v590
  %v596 = vmul.f32 %v588, 0.0
  %v597 = vmul.f32 %v419, %v592
  %v598 = vmul.f32 %v421, %v590
  %s599 = scalar_lea.vmem %s2, 192
  %v600 = vld [vmem:[%s599] sm:$0xff]
  %v601 = vld [vmem:[%s599 + $0x8] sm:$0xff]
  %604 = vrot.lane.b32.xlu0 %v600, 126
  %v605 = vpop.permute.xlu0 %604
  %606 = vrot.lane.b32.xlu0 %v601, 126
  %v607 = vpop.permute.xlu0 %606
  %v608 = vsel %vm183, %v605, %v607
  %v612 = vmul.f32 %v605, 0.0
  %v613 = vmul.f32 %v419, %v608
  %v614 = vmul.f32 %v421, %v607
  %s615 = scalar_lea.vmem %s2, 224
  %v616 = vld [vmem:[%s615] sm:$0xff]
  %v617 = vld [vmem:[%s615 + $0x8] sm:$0xff]
  %620 = vrot.lane.b32.xlu0 %v616, 2
  %v621 = vpop.permute.xlu0 %620
  %622 = vrot.lane.b32.xlu0 %v617, 2
  %v623 = vpop.permute.xlu0 %622
  %vm624 = vcmask 15360
  %v625 = vsel %vm624, %v621, %v623
  %v629 = vmul.f32 %v419, %v621
  %v630 = vmul.f32 %v421, %v625
  %v631 = vmul.f32 %v623, 0.0
  %s632 = scalar_lea.vmem %s2, 240
  %v633 = vld [vmem:[%s632] sm:$0xff]
  %v634 = vld [vmem:[%s632 + $0x8] sm:$0xff]
  %637 = vrot.lane.b32.xlu0 %v633, 30
  %v638 = vpop.permute.xlu0 %637
  %639 = vrot.lane.b32.xlu0 %v634, 30
  %v640 = vpop.permute.xlu0 %639
  %vm641 = vcmask 244736
  %v642 = vsel %vm641, %v638, %v640
  %v646 = vmul.f32 %v419, %v638
  %v647 = vmul.f32 %v421, %v642
  %v648 = vmul.f32 %v640, 0.0
  %s649 = scalar_lea.vmem %s2, 256
  %v650 = vld [vmem:[%s649] sm:$0xff]
  %v651 = vld [vmem:[%s649 + $0x8] sm:$0xff]
  %654 = vrot.lane.b32.xlu0 %v650, 32
  %v655 = vpop.permute.xlu0 %654
  %656 = vrot.lane.b32.xlu0 %v651, 32
  %v657 = vpop.permute.xlu0 %656
  %vm658 = vcmask 261120
  %v659 = vsel %vm658, %v655, %v657
  %v663 = vmul.f32 %v419, %v655
  %v664 = vmul.f32 %v421, %v659
  %v665 = vmul.f32 %v657, 0.0
  %s666 = scalar_lea.vmem %s2, 272
  %v667 = vld [vmem:[%s666] sm:$0xff]
  %v668 = vld [vmem:[%s666 + $0x8] sm:$0xff]
  %671 = vrot.lane.b32.xlu0 %v667, 34
  %v672 = vpop.permute.xlu0 %671
  %673 = vrot.lane.b32.xlu0 %v668, 34
  %v674 = vpop.permute.xlu0 %673
  %vm675 = vcmask 277504
  %v676 = vsel %vm675, %v672, %v674
  %v680 = vmul.f32 %v419, %v672
  %v681 = vmul.f32 %v421, %v676
  %v682 = vmul.f32 %v674, 0.0
  %s683 = scalar_lea.vmem %s2, 288
  %v684 = vld [vmem:[%s683] sm:$0xff]
  %v685 = vld [vmem:[%s683 + $0x8] sm:$0xff]
  %688 = vrot.lane.b32.xlu0 %v684, 77
  %v689 = vpop.permute.xlu0 %688
  %690 = vrot.lane.b32.xlu0 %v685, 77
  %v691 = vpop.permute.xlu0 %690
  %vm692 = vcmask 629760
  %v693 = vsel %vm692, %v689, %v691
  %v697 = vmul.f32 %v689, 0.0
  %v698 = vmul.f32 %v419, %v693
  %v699 = vmul.f32 %v421, %v691
  %s700 = scalar_lea.vmem %s2, 304
  %v701 = vld [vmem:[%s700] sm:$0xff]
  %v702 = vld [vmem:[%s700 + $0x8] sm:$0xff]
  %705 = vrot.lane.b32.xlu0 %v701, 80
  %v706 = vpop.permute.xlu0 %705
  %707 = vrot.lane.b32.xlu0 %v702, 80
  %v708 = vpop.permute.xlu0 %707
  %vm709 = vcmask 654336
  %v710 = vsel %vm709, %v706, %v708
  %v714 = vmul.f32 %v706, 0.0
  %v715 = vmul.f32 %v419, %v710
  %v716 = vmul.f32 %v421, %v708
  %s717 = scalar_lea.vmem %s2, 320
  %v718 = vld [vmem:[%s717] sm:$0xff]
  %v719 = vld [vmem:[%s717 + $0x8] sm:$0xff]
  %722 = vrot.lane.b32.xlu0 %v718, 83
  %v723 = vpop.permute.xlu0 %722
  %724 = vrot.lane.b32.xlu0 %v719, 83
  %v725 = vpop.permute.xlu0 %724
  %vm726 = vcmask 678912
  %v727 = vsel %vm726, %v723, %v725
  %v731 = vmul.f32 %v723, 0.0
  %v732 = vmul.f32 %v419, %v727
  %v733 = vmul.f32 %v421, %v725
  %s734 = scalar_lea.vmem %s2, 336
  %v735 = vld [vmem:[%s734] sm:$0xff]
  %v736 = vld [vmem:[%s734 + $0x8] sm:$0xff]
  %739 = vrot.lane.b32.xlu0 %v735, 125
  %v740 = vpop.permute.xlu0 %739
  %741 = vrot.lane.b32.xlu0 %v736, 125
  %v742 = vpop.permute.xlu0 %741
  %vm743 = vcmask 1022976
  %v744 = vsel %vm743, %v740, %v742
  %v748 = vmul.f32 %v740, 0.0
  %v749 = vmul.f32 %v419, %v744
  %v750 = vmul.f32 %v421, %v742
  %s751 = scalar_lea.vmem %s2, 368
  %v752 = vld [vmem:[%s751] sm:$0xff]
  %v753 = vld [vmem:[%s751 + $0x8] sm:$0xff]
  %756 = vrot.lane.b32.xlu0 %v752, 3
  %v757 = vpop.permute.xlu0 %756
  %758 = vrot.lane.b32.xlu0 %v753, 3
  %v759 = vpop.permute.xlu0 %758
  %vm760 = vcmask 23552
  %v761 = vsel %vm760, %v757, %v759
  %v765 = vmul.f32 %v419, %v757
  %v766 = vmul.f32 %v421, %v761
  %v767 = vmul.f32 %v759, 0.0
  %s768 = scalar_lea.vmem %s2, 384
  %v769 = vld [vmem:[%s768] sm:$0xff]
  %v770 = vld [vmem:[%s768 + $0x8] sm:$0xff]
  %773 = vrot.lane.b32.xlu0 %v769, 45
  %v774 = vpop.permute.xlu0 %773
  %775 = vrot.lane.b32.xlu0 %v770, 45
  %v776 = vpop.permute.xlu0 %775
  %vm777 = vcmask 367616
  %v778 = vsel %vm777, %v774, %v776
  %v782 = vmul.f32 %v419, %v774
  %v783 = vmul.f32 %v421, %v778
  %v784 = vmul.f32 %v776, 0.0
  %s785 = scalar_lea.vmem %s2, 400
  %v786 = vld [vmem:[%s785] sm:$0xff]
  %v787 = vld [vmem:[%s785 + $0x8] sm:$0xff]
  %790 = vrot.lane.b32.xlu0 %v786, 48
  %v791 = vpop.permute.xlu0 %790
  %792 = vrot.lane.b32.xlu0 %v787, 48
  %v793 = vpop.permute.xlu0 %792
  %vm794 = vcmask 392192
  %v795 = vsel %vm794, %v791, %v793
  %v799 = vmul.f32 %v419, %v791
  %v800 = vmul.f32 %v421, %v795
  %v801 = vmul.f32 %v793, 0.0
  %s802 = scalar_lea.vmem %s2, 416
  %v803 = vld [vmem:[%s802] sm:$0xff]
  %v804 = vld [vmem:[%s802 + $0x8] sm:$0xff]
  %807 = vrot.lane.b32.xlu0 %v803, 51
  %v808 = vpop.permute.xlu0 %807
  %809 = vrot.lane.b32.xlu0 %v804, 51
  %v810 = vpop.permute.xlu0 %809
  %vm811 = vcmask 416768
  %v812 = vsel %vm811, %v808, %v810
  %v816 = vmul.f32 %v419, %v808
  %v817 = vmul.f32 %v421, %v812
  %v818 = vmul.f32 %v810, 0.0
  %822 = vrot.lane.b32.xlu0 %v451, 127
  %v823 = vpop.permute.xlu0 %822
  %824 = vrot.lane.b32.xlu0 %v452, 127
  %v825 = vpop.permute.xlu0 %824
  %826 = vrot.lane.b32.xlu0 %v453, 127
  %v827 = vpop.permute.xlu0 %826
  %v828 = vsel %vm87, %v823, %v825
  %v829 = vsel %vm87, %v825, %v827
  %833 = vrot.lane.b32.xlu0 %v467, 126
  %v834 = vpop.permute.xlu0 %833
  %835 = vrot.lane.b32.xlu0 %v468, 126
  %v836 = vpop.permute.xlu0 %835
  %837 = vrot.lane.b32.xlu0 %v469, 126
  %v838 = vpop.permute.xlu0 %837
  %v839 = vsel %vm183, %v834, %v836
  %v840 = vsel %vm183, %v836, %v838
  %844 = vrot.lane.b32.xlu0 %v483, 112
  %v845 = vpop.permute.xlu0 %844
  %846 = vrot.lane.b32.xlu0 %v484, 112
  %v847 = vpop.permute.xlu0 %846
  %848 = vrot.lane.b32.xlu0 %v485, 112
  %v849 = vpop.permute.xlu0 %848
  %v850 = vsel %vm53, %v845, %v847
  %v851 = vsel %vm53, %v847, %v849
  %854 = vrot.lane.b32.xlu0 %v419, 111
  %v855 = vpop.permute.xlu0 %854
  %856 = vrot.lane.b32.xlu0 %v421, 111
  %v857 = vpop.permute.xlu0 %856
  %v858 = vsel %vm36, %v855, %v857
  %862 = vrot.lane.b32.xlu0 %v499, 110
  %v863 = vpop.permute.xlu0 %862
  %864 = vrot.lane.b32.xlu0 %v500, 110
  %v865 = vpop.permute.xlu0 %864
  %866 = vrot.lane.b32.xlu0 %v501, 110
  %v867 = vpop.permute.xlu0 %866
  %v868 = vsel %vm213, %v863, %v865
  %v869 = vsel %vm213, %v865, %v867
  %873 = vrot.lane.b32.xlu0 %v515, 96
  %v874 = vpop.permute.xlu0 %873
  %875 = vrot.lane.b32.xlu0 %v516, 96
  %v876 = vpop.permute.xlu0 %875
  %877 = vrot.lane.b32.xlu0 %v517, 96
  %v878 = vpop.permute.xlu0 %877
  %v879 = vsel %vm225, %v874, %v876
  %v880 = vsel %vm225, %v876, %v878
  %884 = vrot.lane.b32.xlu0 %v531, 95
  %v885 = vpop.permute.xlu0 %884
  %886 = vrot.lane.b32.xlu0 %v532, 95
  %v887 = vpop.permute.xlu0 %886
  %888 = vrot.lane.b32.xlu0 %v533, 95
  %v889 = vpop.permute.xlu0 %888
  %v890 = vsel %vm237, %v885, %v887
  %v891 = vsel %vm237, %v887, %v889
  %895 = vrot.lane.b32.xlu0 %v547, 94
  %v896 = vpop.permute.xlu0 %895
  %897 = vrot.lane.b32.xlu0 %v548, 94
  %v898 = vpop.permute.xlu0 %897
  %899 = vrot.lane.b32.xlu0 %v549, 94
  %v900 = vpop.permute.xlu0 %899
  %v901 = vsel %vm249, %v896, %v898
  %v902 = vsel %vm249, %v898, %v900
  %906 = vrot.lane.b32.xlu0 %v563, 17
  %v907 = vpop.permute.xlu0 %906
  %908 = vrot.lane.b32.xlu0 %v564, 17
  %v909 = vpop.permute.xlu0 %908
  %910 = vrot.lane.b32.xlu0 %v565, 17
  %v911 = vpop.permute.xlu0 %910
  %v912 = vsel %vm155, %v907, %v909
  %v913 = vsel %vm155, %v909, %v911
  %917 = vrot.lane.b32.xlu0 %v579, 15
  %v918 = vpop.permute.xlu0 %917
  %919 = vrot.lane.b32.xlu0 %v580, 15
  %v920 = vpop.permute.xlu0 %919
  %921 = vrot.lane.b32.xlu0 %v581, 15
  %v922 = vpop.permute.xlu0 %921
  %v923 = vsel %vm121, %v918, %v920
  %v924 = vsel %vm121, %v920, %v922
  %928 = vrot.lane.b32.xlu0 %v596, 13
  %v929 = vpop.permute.xlu0 %928
  %930 = vrot.lane.b32.xlu0 %v597, 13
  %v931 = vpop.permute.xlu0 %930
  %932 = vrot.lane.b32.xlu0 %v598, 13
  %v933 = vpop.permute.xlu0 %932
  %vm934 = vcmask 105472
  %v935 = vsel %vm934, %v929, %v931
  %v936 = vsel %vm934, %v931, %v933
  %940 = vrot.lane.b32.xlu0 %v612, 113
  %v941 = vpop.permute.xlu0 %940
  %942 = vrot.lane.b32.xlu0 %v613, 113
  %v943 = vpop.permute.xlu0 %942
  %944 = vrot.lane.b32.xlu0 %v614, 113
  %v945 = vpop.permute.xlu0 %944
  %v946 = vsel %vm70, %v941, %v943
  %v947 = vsel %vm70, %v943, %v945
  %951 = vrot.lane.b32.xlu0 %v629, 109
  %v952 = vpop.permute.xlu0 %951
  %953 = vrot.lane.b32.xlu0 %v630, 109
  %v954 = vpop.permute.xlu0 %953
  %955 = vrot.lane.b32.xlu0 %v631, 109
  %v956 = vpop.permute.xlu0 %955
  %vm957 = vcmask 891904
  %v958 = vsel %vm957, %v952, %v954
  %v959 = vsel %vm957, %v954, %v956
  %963 = vrot.lane.b32.xlu0 %v646, 81
  %v964 = vpop.permute.xlu0 %963
  %965 = vrot.lane.b32.xlu0 %v647, 81
  %v966 = vpop.permute.xlu0 %965
  %967 = vrot.lane.b32.xlu0 %v648, 81
  %v968 = vpop.permute.xlu0 %967
  %vm969 = vcmask 662528
  %v970 = vsel %vm969, %v964, %v966
  %v971 = vsel %vm969, %v966, %v968
  %975 = vrot.lane.b32.xlu0 %v680, 126
  %v976 = vpop.permute.xlu0 %975
  %977 = vrot.lane.b32.xlu0 %v681, 126
  %v978 = vpop.permute.xlu0 %977
  %979 = vrot.lane.b32.xlu0 %v682, 126
  %v980 = vpop.permute.xlu0 %979
  %v981 = vsel %vm183, %v976, %v978
  %v982 = vsel %vm183, %v978, %v980
  %986 = vrot.lane.b32.xlu0 %v697, 83
  %v987 = vpop.permute.xlu0 %986
  %988 = vrot.lane.b32.xlu0 %v698, 83
  %v989 = vpop.permute.xlu0 %988
  %990 = vrot.lane.b32.xlu0 %v699, 83
  %v991 = vpop.permute.xlu0 %990
  %v992 = vsel %vm726, %v987, %v989
  %v993 = vsel %vm726, %v989, %v991
  %997 = vrot.lane.b32.xlu0 %v714, 80
  %v998 = vpop.permute.xlu0 %997
  %999 = vrot.lane.b32.xlu0 %v715, 80
  %v1000 = vpop.permute.xlu0 %999
  %1001 = vrot.lane.b32.xlu0 %v716, 80
  %v1002 = vpop.permute.xlu0 %1001
  %v1003 = vsel %vm709, %v998, %v1000
  %v1004 = vsel %vm709, %v1000, %v1002
  %1008 = vrot.lane.b32.xlu0 %v731, 77
  %v1009 = vpop.permute.xlu0 %1008
  %1010 = vrot.lane.b32.xlu0 %v732, 77
  %v1011 = vpop.permute.xlu0 %1010
  %1012 = vrot.lane.b32.xlu0 %v733, 77
  %v1013 = vpop.permute.xlu0 %1012
  %v1014 = vsel %vm692, %v1009, %v1011
  %v1015 = vsel %vm692, %v1011, %v1013
  %1019 = vrot.lane.b32.xlu0 %v748, 35
  %v1020 = vpop.permute.xlu0 %1019
  %1021 = vrot.lane.b32.xlu0 %v749, 35
  %v1022 = vpop.permute.xlu0 %1021
  %1023 = vrot.lane.b32.xlu0 %v750, 35
  %v1024 = vpop.permute.xlu0 %1023
  %vm1025 = vcmask 285696
  %v1026 = vsel %vm1025, %v1020, %v1022
  %v1027 = vsel %vm1025, %v1022, %v1024
  %1028 = vrot.lane.b32.xlu0 %v419, 32
  %v1029 = vpop.permute.xlu0 %1028
  %1030 = vrot.lane.b32.xlu0 %v421, 32
  %v1031 = vpop.permute.xlu0 %1030
  %v1032 = vsel %vm658, %v1029, %v1031
  %1036 = vrot.lane.b32.xlu0 %v765, 29
  %v1037 = vpop.permute.xlu0 %1036
  %1038 = vrot.lane.b32.xlu0 %v766, 29
  %v1039 = vpop.permute.xlu0 %1038
  %1040 = vrot.lane.b32.xlu0 %v767, 29
  %v1041 = vpop.permute.xlu0 %1040
  %vm1042 = vcmask 236544
  %v1043 = vsel %vm1042, %v1037, %v1039
  %v1044 = vsel %vm1042, %v1039, %v1041
  %1048 = vrot.lane.b32.xlu0 %v782, 115
  %v1049 = vpop.permute.xlu0 %1048
  %1050 = vrot.lane.b32.xlu0 %v783, 115
  %v1051 = vpop.permute.xlu0 %1050
  %1052 = vrot.lane.b32.xlu0 %v784, 115
  %v1053 = vpop.permute.xlu0 %1052
  %vm1054 = vcmask 941056
  %v1055 = vsel %vm1054, %v1049, %v1051
  %v1056 = vsel %vm1054, %v1051, %v1053
  %1060 = vrot.lane.b32.xlu0 %v799, 112
  %v1061 = vpop.permute.xlu0 %1060
  %1062 = vrot.lane.b32.xlu0 %v800, 112
  %v1063 = vpop.permute.xlu0 %1062
  %1064 = vrot.lane.b32.xlu0 %v801, 112
  %v1065 = vpop.permute.xlu0 %1064
  %v1066 = vsel %vm53, %v1061, %v1063
  %v1067 = vsel %vm53, %v1063, %v1065
  %1071 = vrot.lane.b32.xlu0 %v816, 109
  %v1072 = vpop.permute.xlu0 %1071
  %1073 = vrot.lane.b32.xlu0 %v817, 109
  %v1074 = vpop.permute.xlu0 %1073
  %1075 = vrot.lane.b32.xlu0 %v818, 109
  %v1076 = vpop.permute.xlu0 %1075
  %v1077 = vsel %vm957, %v1072, %v1074
  %v1078 = vsel %vm957, %v1074, %v1076
  %1082 = vrot.lane.b32.xlu0 %v663, 79
  %v1083 = vpop.permute.xlu0 %1082
  %1084 = vrot.lane.b32.xlu0 %v664, 79
  %v1085 = vpop.permute.xlu0 %1084
  %1086 = vrot.lane.b32.xlu0 %v665, 79
  %v1087 = vpop.permute.xlu0 %1086
  %1088 = vrot.lane.b32.xlu0 %v981, 79
  %v1089 = vpop.permute.xlu0 %1088
  %1090 = vrot.lane.b32.xlu0 %v982, 79
  %v1091 = vpop.permute.xlu0 %1090
  %1092 = vrot.lane.b32.xlu0 %v980, 79
  %v1093 = vpop.permute.xlu0 %1092
  %1094 = vrot.lane.b32.xlu0 %v992, 79
  %v1095 = vpop.permute.xlu0 %1094
  %1096 = vrot.lane.b32.xlu0 %v993, 79
  %v1097 = vpop.permute.xlu0 %1096
  %1098 = vrot.lane.b32.xlu0 %v991, 79
  %v1099 = vpop.permute.xlu0 %1098
  %1100 = vrot.lane.b32.xlu0 %v1003, 79
  %v1101 = vpop.permute.xlu0 %1100
  %1102 = vrot.lane.b32.xlu0 %v1004, 79
  %v1103 = vpop.permute.xlu0 %1102
  %1104 = vrot.lane.b32.xlu0 %v1002, 79
  %v1105 = vpop.permute.xlu0 %1104
  %1106 = vrot.lane.b32.xlu0 %v1014, 79
  %v1107 = vpop.permute.xlu0 %1106
  %1108 = vrot.lane.b32.xlu0 %v1015, 79
  %v1109 = vpop.permute.xlu0 %1108
  %1110 = vrot.lane.b32.xlu0 %v1013, 79
  %v1111 = vpop.permute.xlu0 %1110
  %1112 = vrot.lane.b32.xlu0 %v1026, 79
  %v1113 = vpop.permute.xlu0 %1112
  %1114 = vrot.lane.b32.xlu0 %v1027, 79
  %v1115 = vpop.permute.xlu0 %1114
  %1116 = vrot.lane.b32.xlu0 %v1024, 79
  %v1117 = vpop.permute.xlu0 %1116
  %1118 = vrot.lane.b32.xlu0 %v1029, 79
  %v1119 = vpop.permute.xlu0 %1118
  %1120 = vrot.lane.b32.xlu0 %v1032, 79
  %v1121 = vpop.permute.xlu0 %1120
  %1122 = vrot.lane.b32.xlu0 %v1031, 79
  %v1123 = vpop.permute.xlu0 %1122
  %1124 = vrot.lane.b32.xlu0 %v1037, 79
  %v1125 = vpop.permute.xlu0 %1124
  %1126 = vrot.lane.b32.xlu0 %v1043, 79
  %v1127 = vpop.permute.xlu0 %1126
  %1128 = vrot.lane.b32.xlu0 %v1044, 79
  %v1129 = vpop.permute.xlu0 %1128
  %1130 = vrot.lane.b32.xlu0 %v1055, 79
  %v1131 = vpop.permute.xlu0 %1130
  %1132 = vrot.lane.b32.xlu0 %v1056, 79
  %v1133 = vpop.permute.xlu0 %1132
  %1134 = vrot.lane.b32.xlu0 %v1053, 79
  %v1135 = vpop.permute.xlu0 %1134
  %1136 = vrot.lane.b32.xlu0 %v1066, 79
  %v1137 = vpop.permute.xlu0 %1136
  %1138 = vrot.lane.b32.xlu0 %v1067, 79
  %v1139 = vpop.permute.xlu0 %1138
  %1140 = vrot.lane.b32.xlu0 %v1065, 79
  %v1141 = vpop.permute.xlu0 %1140
  %1142 = vrot.lane.b32.xlu0 %v1077, 79
  %v1143 = vpop.permute.xlu0 %1142
  %1144 = vrot.lane.b32.xlu0 %v1078, 79
  %v1145 = vpop.permute.xlu0 %1144
  %1146 = vrot.lane.b32.xlu0 %v1076, 79
  %v1147 = vpop.permute.xlu0 %1146
  %vm1148 = vcmask 646144
  %v1149 = vsel %vm1148, %v1083, %v1085
  %v1150 = vsel %vm1148, %v1085, %v1087
  %v1151 = vsel %vm1148, %v1089, %v1091
  %v1152 = vsel %vm1148, %v1091, %v1093
  %v1153 = vsel %vm1148, %v1095, %v1097
  %v1154 = vsel %vm1148, %v1097, %v1099
  %v1155 = vsel %vm1148, %v1101, %v1103
  %v1156 = vsel %vm1148, %v1103, %v1105
  %v1157 = vsel %vm1148, %v1107, %v1109
  %v1158 = vsel %vm1148, %v1109, %v1111
  %v1159 = vsel %vm1148, %v1113, %v1115
  %v1160 = vsel %vm1148, %v1115, %v1117
  %v1161 = vsel %vm1148, %v1119, %v1121
  %v1162 = vsel %vm1148, %v1121, %v1123
  %v1163 = vsel %vm1148, %v1125, %v1127
  %v1164 = vsel %vm1148, %v1127, %v1129
  %v1165 = vsel %vm1148, %v1131, %v1133
  %v1166 = vsel %vm1148, %v1133, %v1135
  %v1167 = vsel %vm1148, %v1137, %v1139
  %v1168 = vsel %vm1148, %v1139, %v1141
  %v1169 = vsel %vm1148, %v1143, %v1145
  %v1170 = vsel %vm1148, %v1145, %v1147
  %v1171 = vld [vmem:[%s5] sm:$0xff]
  %v1172 = vld [vmem:[%s5 + $0x8] sm:$0xff]
  %v1173 = vld [vmem:[%s5 + $0x10] sm:$0xff]
  %v1174 = vld [vmem:[%s5 + $0x18] sm:$0xff]
  %v1175 = vld [vmem:[%s5 + $0x20] sm:$0xff]
  %v1176 = vld [vmem:[%s5 + $0x28] sm:$0xff]
  %v1177 = vld [vmem:[%s5 + $0x30] sm:$0xff]
  %v1178 = vld [vmem:[%s5 + $0x38] sm:$0xff]
  %v1179 = vld [vmem:[%s6] sm:$0xff]
  %v1180 = vld [vmem:[%s6 + $0x8] sm:$0xff]
  %v1181 = vld [vmem:[%s6 + $0x10] sm:$0xff]
  %v1182 = vld [vmem:[%s6 + $0x18] sm:$0xff]
  %v1183 = vld [vmem:[%s6 + $0x20] sm:$0xff]
  %v1184 = vld [vmem:[%s6 + $0x28] sm:$0xff]
  %v1185 = vld [vmem:[%s6 + $0x30] sm:$0xff]
  %v1186 = vld [vmem:[%s6 + $0x38] sm:$0xff]
  %1190 = vrot.lane.b32.xlu0 %v435, 17
  %v1191 = vpop.permute.xlu0 %1190
  %1192 = vrot.lane.b32.xlu0 %v436, 17
  %v1193 = vpop.permute.xlu0 %1192
  %1194 = vrot.lane.b32.xlu0 %v437, 17
  %v1195 = vpop.permute.xlu0 %1194
  %1196 = vrot.lane.b32.xlu0 %v828, 17
  %v1197 = vpop.permute.xlu0 %1196
  %1198 = vrot.lane.b32.xlu0 %v829, 17
  %v1199 = vpop.permute.xlu0 %1198
  %1200 = vrot.lane.b32.xlu0 %v827, 17
  %v1201 = vpop.permute.xlu0 %1200
  %1202 = vrot.lane.b32.xlu0 %v839, 17
  %v1203 = vpop.permute.xlu0 %1202
  %1204 = vrot.lane.b32.xlu0 %v840, 17
  %v1205 = vpop.permute.xlu0 %1204
  %1206 = vrot.lane.b32.xlu0 %v838, 17
  %v1207 = vpop.permute.xlu0 %1206
  %1208 = vrot.lane.b32.xlu0 %v850, 17
  %v1209 = vpop.permute.xlu0 %1208
  %1210 = vrot.lane.b32.xlu0 %v851, 17
  %v1211 = vpop.permute.xlu0 %1210
  %1212 = vrot.lane.b32.xlu0 %v849, 17
  %v1213 = vpop.permute.xlu0 %1212
  %1214 = vrot.lane.b32.xlu0 %v855, 17
  %v1215 = vpop.permute.xlu0 %1214
  %1216 = vrot.lane.b32.xlu0 %v858, 17
  %v1217 = vpop.permute.xlu0 %1216
  %1218 = vrot.lane.b32.xlu0 %v857, 17
  %v1219 = vpop.permute.xlu0 %1218
  %1220 = vrot.lane.b32.xlu0 %v863, 17
  %v1221 = vpop.permute.xlu0 %1220
  %1222 = vrot.lane.b32.xlu0 %v868, 17
  %v1223 = vpop.permute.xlu0 %1222
  %1224 = vrot.lane.b32.xlu0 %v869, 17
  %v1225 = vpop.permute.xlu0 %1224
  %1226 = vrot.lane.b32.xlu0 %v874, 17
  %v1227 = vpop.permute.xlu0 %1226
  %1228 = vrot.lane.b32.xlu0 %v879, 17
  %v1229 = vpop.permute.xlu0 %1228
  %1230 = vrot.lane.b32.xlu0 %v880, 17
  %v1231 = vpop.permute.xlu0 %1230
  %1232 = vrot.lane.b32.xlu0 %v885, 17
  %v1233 = vpop.permute.xlu0 %1232
  %1234 = vrot.lane.b32.xlu0 %v890, 17
  %v1235 = vpop.permute.xlu0 %1234
  %1236 = vrot.lane.b32.xlu0 %v891, 17
  %v1237 = vpop.permute.xlu0 %1236
  %1238 = vrot.lane.b32.xlu0 %v896, 17
  %v1239 = vpop.permute.xlu0 %1238
  %1240 = vrot.lane.b32.xlu0 %v901, 17
  %v1241 = vpop.permute.xlu0 %1240
  %1242 = vrot.lane.b32.xlu0 %v902, 17
  %v1243 = vpop.permute.xlu0 %1242
  %1244 = vrot.lane.b32.xlu0 %v907, 17
  %v1245 = vpop.permute.xlu0 %1244
  %1246 = vrot.lane.b32.xlu0 %v912, 17
  %v1247 = vpop.permute.xlu0 %1246
  %1248 = vrot.lane.b32.xlu0 %v913, 17
  %v1249 = vpop.permute.xlu0 %1248
  %1250 = vrot.lane.b32.xlu0 %v918, 17
  %v1251 = vpop.permute.xlu0 %1250
  %1252 = vrot.lane.b32.xlu0 %v923, 17
  %v1253 = vpop.permute.xlu0 %1252
  %1254 = vrot.lane.b32.xlu0 %v924, 17
  %v1255 = vpop.permute.xlu0 %1254
  %1256 = vrot.lane.b32.xlu0 %v929, 17
  %v1257 = vpop.permute.xlu0 %1256
  %1258 = vrot.lane.b32.xlu0 %v935, 17
  %v1259 = vpop.permute.xlu0 %1258
  %1260 = vrot.lane.b32.xlu0 %v936, 17
  %v1261 = vpop.permute.xlu0 %1260
  %1262 = vrot.lane.b32.xlu0 %v946, 17
  %v1263 = vpop.permute.xlu0 %1262
  %1264 = vrot.lane.b32.xlu0 %v947, 17
  %v1265 = vpop.permute.xlu0 %1264
  %1266 = vrot.lane.b32.xlu0 %v945, 17
  %v1267 = vpop.permute.xlu0 %1266
  %1268 = vrot.lane.b32.xlu0 %v952, 17
  %v1269 = vpop.permute.xlu0 %1268
  %1270 = vrot.lane.b32.xlu0 %v958, 17
  %v1271 = vpop.permute.xlu0 %1270
  %1272 = vrot.lane.b32.xlu0 %v959, 17
  %v1273 = vpop.permute.xlu0 %1272
  %1274 = vrot.lane.b32.xlu0 %v964, 17
  %v1275 = vpop.permute.xlu0 %1274
  %1276 = vrot.lane.b32.xlu0 %v970, 17
  %v1277 = vpop.permute.xlu0 %1276
  %1278 = vrot.lane.b32.xlu0 %v971, 17
  %v1279 = vpop.permute.xlu0 %1278
  %1280 = vrot.lane.b32.xlu0 %v1083, 17
  %v1281 = vpop.permute.xlu0 %1280
  %1282 = vrot.lane.b32.xlu0 %v1149, 17
  %v1283 = vpop.permute.xlu0 %1282
  %1284 = vrot.lane.b32.xlu0 %v1150, 17
  %v1285 = vpop.permute.xlu0 %1284
  %1286 = vrot.lane.b32.xlu0 %v1089, 17
  %v1287 = vpop.permute.xlu0 %1286
  %1288 = vrot.lane.b32.xlu0 %v1151, 17
  %v1289 = vpop.permute.xlu0 %1288
  %1290 = vrot.lane.b32.xlu0 %v1152, 17
  %v1291 = vpop.permute.xlu0 %1290
  %1292 = vrot.lane.b32.xlu0 %v1095, 17
  %v1293 = vpop.permute.xlu0 %1292
  %1294 = vrot.lane.b32.xlu0 %v1153, 17
  %v1295 = vpop.permute.xlu0 %1294
  %1296 = vrot.lane.b32.xlu0 %v1154, 17
  %v1297 = vpop.permute.xlu0 %1296
  %1298 = vrot.lane.b32.xlu0 %v1101, 17
  %v1299 = vpop.permute.xlu0 %1298
  %1300 = vrot.lane.b32.xlu0 %v1155, 17
  %v1301 = vpop.permute.xlu0 %1300
  %1302 = vrot.lane.b32.xlu0 %v1156, 17
  %v1303 = vpop.permute.xlu0 %1302
  %1304 = vrot.lane.b32.xlu0 %v1107, 17
  %v1305 = vpop.permute.xlu0 %1304
  %1306 = vrot.lane.b32.xlu0 %v1157, 17
  %v1307 = vpop.permute.xlu0 %1306
  %1308 = vrot.lane.b32.xlu0 %v1158, 17
  %v1309 = vpop.permute.xlu0 %1308
  %1310 = vrot.lane.b32.xlu0 %v1113, 17
  %v1311 = vpop.permute.xlu0 %1310
  %1312 = vrot.lane.b32.xlu0 %v1159, 17
  %v1313 = vpop.permute.xlu0 %1312
  %1314 = vrot.lane.b32.xlu0 %v1160, 17
  %v1315 = vpop.permute.xlu0 %1314
  %1316 = vrot.lane.b32.xlu0 %v1119, 17
  %v1317 = vpop.permute.xlu0 %1316
  %1318 = vrot.lane.b32.xlu0 %v1161, 17
  %v1319 = vpop.permute.xlu0 %1318
  %1320 = vrot.lane.b32.xlu0 %v1162, 17
  %v1321 = vpop.permute.xlu0 %1320
  %1322 = vrot.lane.b32.xlu0 %v1125, 17
  %v1323 = vpop.permute.xlu0 %1322
  %1324 = vrot.lane.b32.xlu0 %v1163, 17
  %v1325 = vpop.permute.xlu0 %1324
  %1326 = vrot.lane.b32.xlu0 %v1164, 17
  %v1327 = vpop.permute.xlu0 %1326
  %1328 = vrot.lane.b32.xlu0 %v1131, 17
  %v1329 = vpop.permute.xlu0 %1328
  %1330 = vrot.lane.b32.xlu0 %v1165, 17
  %v1331 = vpop.permute.xlu0 %1330
  %1332 = vrot.lane.b32.xlu0 %v1166, 17
  %v1333 = vpop.permute.xlu0 %1332
  %1334 = vrot.lane.b32.xlu0 %v1137, 17
  %v1335 = vpop.permute.xlu0 %1334
  %1336 = vrot.lane.b32.xlu0 %v1167, 17
  %v1337 = vpop.permute.xlu0 %1336
  %1338 = vrot.lane.b32.xlu0 %v1168, 17
  %v1339 = vpop.permute.xlu0 %1338
  %1340 = vrot.lane.b32.xlu0 %v1143, 17
  %v1341 = vpop.permute.xlu0 %1340
  %1342 = vrot.lane.b32.xlu0 %v1169, 17
  %v1343 = vpop.permute.xlu0 %1342
  %1344 = vrot.lane.b32.xlu0 %v1170, 17
  %v1345 = vpop.permute.xlu0 %1344
  %v1346 = vsel %vm155, %v1191, %v1193
  %v1347 = vsel %vm155, %v1193, %v1195
  %v1348 = vsel %vm155, %v1197, %v1199
  %v1349 = vsel %vm155, %v1199, %v1201
  %v1350 = vsel %vm155, %v1203, %v1205
  %v1351 = vsel %vm155, %v1205, %v1207
  %v1352 = vsel %vm155, %v1209, %v1211
  %v1353 = vsel %vm155, %v1211, %v1213
  %v1354 = vsel %vm155, %v1215, %v1217
  %v1355 = vsel %vm155, %v1217, %v1219
  %v1356 = vsel %vm155, %v1221, %v1223
  %v1357 = vsel %vm155, %v1223, %v1225
  %v1358 = vsel %vm155, %v1227, %v1229
  %v1359 = vsel %vm155, %v1229, %v1231
  %v1360 = vsel %vm155, %v1233, %v1235
  %v1361 = vsel %vm155, %v1235, %v1237
  %v1362 = vsel %vm155, %v1239, %v1241
  %v1363 = vsel %vm155, %v1241, %v1243
  %v1364 = vsel %vm155, %v1245, %v1247
  %v1365 = vsel %vm155, %v1247, %v1249
  %v1366 = vsel %vm155, %v1251, %v1253
  %v1367 = vsel %vm155, %v1253, %v1255
  %v1368 = vsel %vm155, %v1257, %v1259
  %v1369 = vsel %vm155, %v1259, %v1261
  %v1370 = vsel %vm155, %v1263, %v1265
  %v1371 = vsel %vm155, %v1265, %v1267
  %v1372 = vsel %vm155, %v1269, %v1271
  %v1373 = vsel %vm155, %v1271, %v1273
  %v1374 = vsel %vm155, %v1275, %v1277
  %v1375 = vsel %vm155, %v1277, %v1279
  %v1376 = vsel %vm155, %v1281, %v1283
  %v1377 = vsel %vm155, %v1283, %v1285
  %v1378 = vsel %vm155, %v1287, %v1289
  %v1379 = vsel %vm155, %v1289, %v1291
  %v1380 = vsel %vm155, %v1293, %v1295
  %v1381 = vsel %vm155, %v1295, %v1297
  %v1382 = vsel %vm155, %v1299, %v1301
  %v1383 = vsel %vm155, %v1301, %v1303
  %v1384 = vsel %vm155, %v1305, %v1307
  %v1385 = vsel %vm155, %v1307, %v1309
  %v1386 = vsel %vm155, %v1311, %v1313
  %v1387 = vsel %vm155, %v1313, %v1315
  %v1388 = vsel %vm155, %v1317, %v1319
  %v1389 = vsel %vm155, %v1319, %v1321
  %v1390 = vsel %vm155, %v1323, %v1325
  %v1391 = vsel %vm155, %v1325, %v1327
  %v1392 = vsel %vm155, %v1329, %v1331
  %v1393 = vsel %vm155, %v1331, %v1333
  %v1394 = vsel %vm155, %v1335, %v1337
  %v1395 = vsel %vm155, %v1337, %v1339
  %v1396 = vsel %vm155, %v1341, %v1343
  %v1397 = vsel %vm155, %v1343, %v1345
  %v1451 = vsel %vm225, %v1172, 0
  %v1454 = vsel %vm225, %v1174, 0
  %v1457 = vsel %vm225, %v1176, 0
  %v1460 = vsel %vm225, %v1178, 0
  %1462 = vmatprep.subr.mxu0 %v1347
  %1463 = vmatpush1.msra.mxu0 %v1346
  %1464 = vmatprep.subr.mxu0 %v1349
  %1465 = vmatpush1.msra.mxu0 %v1348
  %1466 = vmatprep.subr.mxu0 %v1351
  %1467 = vmatpush1.msra.mxu0 %v1350
  %1468 = vmatprep.subr.mxu0 %v1353
  %1469 = vmatpush1.msra.mxu0 %v1352
  %1470 = vmatprep.subr.mxu0 %v1355
  %1471 = vmatpush1.msra.mxu0 %v1354
  %1472 = vmatprep.subr.mxu0 %v1357
  %1473 = vmatpush1.msra.mxu0 %v1356
  %1474 = vmatprep.subr.mxu0 %v1359
  %1475 = vmatpush1.msra.mxu0 %v1358
  %1476 = vmatprep.subr.mxu0 %v1361
  %1477 = vmatpush1.msra.mxu0 %v1360
  %1478 = vmatprep.subr.mxu0 %v1363
  %1479 = vmatpush1.msra.mxu0 %v1362
  %1480 = vmatprep.subr.mxu0 %v1365
  %1481 = vmatpush1.msra.mxu0 %v1364
  %1482 = vmatprep.subr.mxu0 %v1367
  %1483 = vmatpush1.msra.mxu0 %v1366
  %1484 = vmatprep.subr.mxu0 %v1369
  %1485 = vmatpush1.msra.mxu0 %v1368
  %1486 = vmatprep.subr.mxu0 %v1371
  %1487 = vmatpush1.msra.mxu0 %v1370
  %1488 = vmatprep.subr.mxu0 %v1355
  %1489 = vmatpush1.msra.mxu0 %v1354
  %1490 = vmatprep.subr.mxu0 %v1373
  %1491 = vmatpush1.msra.mxu0 %v1372
  %1492 = vmatprep.subr.mxu0 %v1375
  %1493 = vmatpush1.msra.mxu0 %v1374
  %1494 = vmatprep.subr.mxu0 %v1377
  %1495 = vmatpush1.msra.mxu0 %v1376
  %1496 = vmatprep.subr.mxu0 %v1379
  %1497 = vmatpush1.msra.mxu0 %v1378
  %1498 = vmatprep.subr.mxu0 %v1381
  %1499 = vmatpush1.msra.mxu0 %v1380
  %1500 = vmatprep.subr.mxu0 %v1383
  %1501 = vmatpush1.msra.mxu0 %v1382
  %1502 = vmatprep.subr.mxu0 %v1385
  %1503 = vmatpush1.msra.mxu0 %v1384
  %1504 = vmatprep.subr.mxu0 %v1387
  %1505 = vmatpush1.msra.mxu0 %v1386
  %1506 = vmatprep.subr.mxu0 %v1389
  %1507 = vmatpush1.msra.mxu0 %v1388
  %1508 = vmatprep.subr.mxu0 %v1391
  %1509 = vmatpush1.msra.mxu0 %v1390
  %1510 = vmatprep.subr.mxu0 %v1393
  %1511 = vmatpush1.msra.mxu0 %v1392
  %1512 = vmatprep.subr.mxu0 %v1395
  %1513 = vmatpush1.msra.mxu0 %v1394
  %1514 = vmatprep.subr.mxu0 %v1397
  %1515 = vmatpush1.msra.mxu0 %v1396
  %1516 = vmatprep.subr.mxu0 %v1389
  %1517 = vmatpush1.msra.mxu0 %v1388
  %1518 = vmatprep.subr.mxu0 0.0
  %1519 = vmatpush1.msra.mxu0 0.0
  %1520 = vmatprep.subr.mxu0 0.0
  %1521 = vmatpush1.msra.mxu0 0.0
  %1522 = vmatprep.subr.mxu0 0.0
  %1523 = vmatpush1.msra.mxu0 0.0
  %1524 = vmatprep.subr.mxu0 0.0
  %1525 = vmatpush1.msra.mxu0 0.0
  %1526 = vmatprep.mubr.f32.mxu0 %v1451
  %1527 = vmatmul.mubr.f32.gmra.mrb[0].mxu0 %v1171
  %v1528 = vpop.f32.mrb[0].mxu0
  %v1529 = vadd.f32 %v1179, %v1528
  %v1530 = vpop.f32.mrb[0].mxu0
  %v1531 = vadd.f32 %v1180, %v1530
  %1532 = vmatprep.mubr.f32.mxu0 %v1454
  %1533 = vmatmul.mubr.f32.gmra.mrb[0].mxu0 %v1173
  %v1534 = vpop.f32.mrb[0].mxu0
  %v1535 = vadd.f32 %v1181, %v1534
  %v1536 = vpop.f32.mrb[0].mxu0
  %v1537 = vadd.f32 %v1182, %v1536
  %1538 = vmatprep.mubr.f32.mxu0 %v1457
  %1539 = vmatmul.mubr.f32.gmra.mrb[0].mxu0 %v1175
  %v1540 = vpop.f32.mrb[0].mxu0
  %v1541 = vadd.f32 %v1183, %v1540
  %v1542 = vpop.f32.mrb[0].mxu0
  %v1543 = vadd.f32 %v1184, %v1542
  %1544 = vmatprep.mubr.f32.mxu0 %v1460
  %1545 = vmatmul.mubr.f32.gmra.mrb[0].mxu0 %v1177
  %v1546 = vpop.f32.mrb[0].mxu0
  %v1547 = vadd.f32 %v1185, %v1546
  %v1548 = vpop.f32.mrb[0].mxu0
  %v1549 = vadd.f32 %v1186, %v1548
  %1550 = vdwg.mxu0
  %1551 = vst [vmem:[%s7] sm:$0xff] %v1529
  %1552 = vst [vmem:[%s7 + $0x8] sm:$0xff] %v1531
  %1553 = vst [vmem:[%s7 + $0x10] sm:$0xff] %v1535
  %1554 = vst [vmem:[%s7 + $0x18] sm:$0xff] %v1537
  %1555 = vst [vmem:[%s7 + $0x20] sm:$0xff] %v1541
  %1556 = vst [vmem:[%s7 + $0x28] sm:$0xff] %v1543
  %1557 = vst [vmem:[%s7 + $0x30] sm:$0xff] %v1547
  %1558 = vst [vmem:[%s7 + $0x38] sm:$0xff] %v1549
  // Predicated region
  $region30: #{c3_block.1} parent=0 // pred_check
    _
  $region31: #{c3_block.1} parent=0 // pred_check_branch
    %1560 = sbr.rel (0) target = $region33
  $region32: #{c3_block.1} parent=0 // pred_region
    _
  $region33: #{c3_block.1} parent=0 // pred_fallthru
    _
  // Predicated region
  $region34: #{c3_block.1} parent=0 // pred_check
    _
  $region35: #{c3_block.1} parent=0 // pred_check_branch
    %1562 = sbr.rel (0) target = $region37
  $region36: #{c3_block.1} parent=0 // pred_region
    _
  $region37: #{c3_block.1} parent=0 // pred_fallthru
    _

</llo_original>
